<compile_context>
chip_gen: v6e
topology: v6e:2x2x1
jax: 0.10.0
libtpu: 0.0.40
codegen_flags: <defaults>
</compile_context>

<pallas_src>
import jax
import jax.numpy as jnp
from jax.experimental import pallas as pl
from jax.experimental.pallas import tpu as pltpu


def _lstm_kernel(x_ref, h0_ref, c0_ref, w1_ref, w2_ref, b_ref,
                 out_ref, hN_ref, cN_ref, seq_sc):
    """Whole stacked LSTM forward in one kernel invocation.

    x_ref : (T*B, I)        h0_ref/c0_ref : (L, B, H)
    w1_ref: (I, 4H)         w2_ref        : (H, 4H)
    b_ref : (1, 4H)         (b1 + b2 pre-summed in the wrapper)
    out_ref: (T*B, H)       hN_ref/cN_ref : (L, B, H)
    seq_sc : VMEM (T*B, H)  current layer's output sequence (feeds next layer).
    """
    TB, I = x_ref.shape
    L, B, H = h0_ref.shape
    T = TB // B

    w1 = w1_ref[...]          # (I, 4H), loaded once
    w2 = w2_ref[...]          # (H, 4H), loaded once
    b = b_ref[...]            # (1, 4H)

    for layer in range(L):                       # static unroll (L small)
        # ---- off the recurrent chain: one batched matmul for the whole
        # sequence, bias folded in here, not per step. ----
        x_slab = x_ref[...] if layer == 0 else seq_sc[...]          # (T*B, I)
        pre = jnp.dot(x_slab, w1,
                      preferred_element_type=jnp.float32) + b       # (T*B, 4H)

        h = h0_ref[layer]                        # (B, H)
        c = c0_ref[layer]                        # (B, H)
        # Last layer writes straight to the output ref (written once);
        # earlier layers write to the VMEM slab consumed by the next layer.
        dst = out_ref if layer == L - 1 else seq_sc

        for t in range(T):                       # static unroll (T small)
            # Recurrent path: single small K=H matmul + one add.
            gates = pre[t * B:(t + 1) * B, :] + jnp.dot(
                h, w2, preferred_element_type=jnp.float32)           # (B, 4H)

            # Whole-vreg activations (one sigmoid pass, one tanh pass),
            # then slice the i/f/g/o blocks out of them.
            sig = jax.nn.sigmoid(gates)
            th = jnp.tanh(gates)
            i_g = sig[:, 0 * H:1 * H]
            f_g = sig[:, 1 * H:2 * H]
            g_g = th[:, 2 * H:3 * H]
            o_g = sig[:, 3 * H:4 * H]

            c = f_g * c + i_g * g_g
            h = o_g * jnp.tanh(c)
            dst[t * B:(t + 1) * B, :] = h

        # Final states written exactly once per layer.
        hN_ref[layer] = h
        cN_ref[layer] = c


@jax.jit
def lstm_forward(inputs, h0, c0, w1, b1, w2, b2):
    """Mirrors LSTM.forward: the same shared cell applied to every layer."""
    T, B, I = inputs.shape
    L, _, H = h0.shape
    G = 4 * H
    # Stacking layers with a single shared cell requires input_size == hidden.
    assert I == H, "shared-cell stacked LSTM requires input_size == hidden_size"

    # Present the sequence as a lane/sublane-friendly 2-D slab; pre-sum biases.
    x_slab = inputs.reshape(T * B, I)
    b = (b1 + b2).reshape(1, G)

    grid_spec = pltpu.PrefetchScalarGridSpec(
        num_scalar_prefetch=0,
        grid=(1,),                               # single grid point; loops in-kernel
        in_specs=[
            pl.BlockSpec((T * B, I), lambda i: (0, 0)),        # x sequence slab
            pl.BlockSpec((L, B, H), lambda i: (0, 0, 0)),      # h0
            pl.BlockSpec((L, B, H), lambda i: (0, 0, 0)),      # c0
            pl.BlockSpec((I, G), lambda i: (0, 0)),            # w1 (fc1)
            pl.BlockSpec((H, G), lambda i: (0, 0)),            # w2 (fc2)
            pl.BlockSpec((1, G), lambda i: (0, 0)),            # b1 + b2
        ],
        out_specs=[
            pl.BlockSpec((T * B, H), lambda i: (0, 0)),        # outputs slab
            pl.BlockSpec((L, B, H), lambda i: (0, 0, 0)),      # h_final
            pl.BlockSpec((L, B, H), lambda i: (0, 0, 0)),      # c_final
        ],
        scratch_shapes=[
            pltpu.VMEM((T * B, H), jnp.float32),               # layer-output slab
        ],
    )

    out_flat, hN, cN = pl.pallas_call(
        _lstm_kernel,
        out_shape=(
            jax.ShapeDtypeStruct((T * B, H), jnp.float32),
            jax.ShapeDtypeStruct((L, B, H), jnp.float32),
            jax.ShapeDtypeStruct((L, B, H), jnp.float32),
        ),
        grid_spec=grid_spec,
        compiler_params=pltpu.CompilerParams(
            dimension_semantics=("arbitrary",)),
    )(x_slab, h0, c0, w1, w2, b)
    return out_flat.reshape(T, B, H), (hN, cN)


def lstm_reference(inputs, h0, c0, w1, b1, w2, b2, num_layers):
    """Pure-jnp reference matching the PyTorch module semantics."""
    T = inputs.shape[0]
    H = h0.shape[-1]
    hx_outs, cx_outs = [], []
    x = inputs
    for layer_id in range(num_layers):
        h, c = h0[layer_id], c0[layer_id]
        outs = []
        for t in range(T):
            gates = x[t] @ w1 + b1 + h @ w2 + b2
            i_g = jax.nn.sigmoid(gates[:, 0 * H:1 * H])
            f_g = jax.nn.sigmoid(gates[:, 1 * H:2 * H])
            g_g = jnp.tanh(gates[:, 2 * H:3 * H])
            o_g = jax.nn.sigmoid(gates[:, 3 * H:4 * H])
            c = f_g * c + i_g * g_g
            h = o_g * jnp.tanh(c)
            outs.append(h[None])
        hx_outs.append(h[None])
        cx_outs.append(c[None])
        x = jnp.concatenate(outs, axis=0)
    return x, (jnp.concatenate(hx_outs, axis=0), jnp.concatenate(cx_outs, axis=0))


if __name__ == "__main__":
    # seq=8, batch=4, input_size == hidden_size == 32 (required for stacking a
    # shared cell), num_layers=2.
    T, B, I, H, L = 8, 4, 32, 32, 2
    G = 4 * H

    key = jax.random.PRNGKey(0)
    k_in, k_h0, k_c0, k_w1, k_b1, k_w2, k_b2 = jax.random.split(key, 7)

    inputs = jax.random.normal(k_in, (T, B, I), dtype=jnp.float32)
    h0 = jax.random.normal(k_h0, (L, B, H), dtype=jnp.float32)
    c0 = jax.random.normal(k_c0, (L, B, H), dtype=jnp.float32)

    # fc1: Linear(I, 4H) -> weight (4H, I), bias (4H,)
    # fc2: Linear(H, 4H) -> weight (4H, H), bias (4H,)
    # Stored pre-transposed so that y = x @ W.T + b.
    scale1 = 1.0 / jnp.sqrt(jnp.float32(I))
    scale2 = 1.0 / jnp.sqrt(jnp.float32(H))
    w1 = (jax.random.uniform(k_w1, (G, I), jnp.float32, -1.0, 1.0) * scale1).T  # (I, 4H)
    b1 = (jax.random.uniform(k_b1, (G,), jnp.float32, -1.0, 1.0) * scale1)[None]  # (1, 4H)
    w2 = (jax.random.uniform(k_w2, (G, H), jnp.float32, -1.0, 1.0) * scale2).T  # (H, 4H)
    b2 = (jax.random.uniform(k_b2, (G,), jnp.float32, -1.0, 1.0) * scale2)[None]  # (1, 4H)

    outputs, (hN, cN) = lstm_forward(inputs, h0, c0, w1, b1, w2, b2)
    jax.block_until_ready((outputs, hN, cN))

    ref_out, (ref_h, ref_c) = lstm_reference(inputs, h0, c0, w1, b1, w2, b2, L)
    assert outputs.shape == (T, B, H) and hN.shape == (L, B, H) and cN.shape == (L, B, H)
    assert jnp.allclose(outputs, ref_out, atol=1e-5, rtol=1e-5)
    assert jnp.allclose(hN, ref_h, atol=1e-5, rtol=1e-5)
    assert jnp.allclose(cN, ref_c, atol=1e-5, rtol=1e-5)

    print("KERNEL_OK")
</pallas_src>

<mosaic_0001>
module attributes {stable_mosaic.version = 11 : i64} {
  func.func @_lstm_kernel(%arg0: i32, %arg1: memref<32x32xf32, #tpu.memory_space<vmem>>, %arg2: memref<2x4x32xf32, #tpu.memory_space<vmem>>, %arg3: memref<2x4x32xf32, #tpu.memory_space<vmem>>, %arg4: memref<32x128xf32, #tpu.memory_space<vmem>>, %arg5: memref<32x128xf32, #tpu.memory_space<vmem>>, %arg6: memref<1x128xf32, #tpu.memory_space<vmem>>, %arg7: memref<32x32xf32, #tpu.memory_space<vmem>>, %arg8: memref<2x4x32xf32, #tpu.memory_space<vmem>>, %arg9: memref<2x4x32xf32, #tpu.memory_space<vmem>>, %arg10: memref<32x32xf32, #tpu.memory_space<vmem>>) attributes {dimension_semantics = [#tpu.dimension_semantics<arbitrary>], iteration_bounds = array<i64: 1>, scalar_prefetch = 0 : i64, scratch_operands = 1 : i64, tpu.core_type = #tpu.core_type<tc>, window_params = [{pipeline_mode = #tpu.pipeline_mode<synchronous>, transform_indices = @transform_0, window_bounds = array<i64: 32, 32>}, {pipeline_mode = #tpu.pipeline_mode<synchronous>, transform_indices = @transform_1, window_bounds = array<i64: 2, 4, 32>}, {pipeline_mode = #tpu.pipeline_mode<synchronous>, transform_indices = @transform_2, window_bounds = array<i64: 2, 4, 32>}, {pipeline_mode = #tpu.pipeline_mode<synchronous>, transform_indices = @transform_3, window_bounds = array<i64: 32, 128>}, {pipeline_mode = #tpu.pipeline_mode<synchronous>, transform_indices = @transform_4, window_bounds = array<i64: 32, 128>}, {pipeline_mode = #tpu.pipeline_mode<synchronous>, transform_indices = @transform_5, window_bounds = array<i64: 1, 128>}, {pipeline_mode = #tpu.pipeline_mode<synchronous>, transform_indices = @transform_6, window_bounds = array<i64: 32, 32>}, {pipeline_mode = #tpu.pipeline_mode<synchronous>, transform_indices = @transform_7, window_bounds = array<i64: 2, 4, 32>}, {pipeline_mode = #tpu.pipeline_mode<synchronous>, transform_indices = @transform_8, window_bounds = array<i64: 2, 4, 32>}]} {
    %c0 = arith.constant 0 : index
    %c0_0 = arith.constant 0 : index
    %0 = vector.load %arg4[%c0, %c0_0] : memref<32x128xf32, #tpu.memory_space<vmem>>, vector<32x128xf32>
    %c0_1 = arith.constant 0 : index
    %c0_2 = arith.constant 0 : index
    %1 = vector.load %arg5[%c0_1, %c0_2] : memref<32x128xf32, #tpu.memory_space<vmem>>, vector<32x128xf32>
    %c0_3 = arith.constant 0 : index
    %c0_4 = arith.constant 0 : index
    %2 = vector.load %arg6[%c0_3, %c0_4] : memref<1x128xf32, #tpu.memory_space<vmem>>, vector<1x128xf32>
    %c0_5 = arith.constant 0 : index
    %c0_6 = arith.constant 0 : index
    %3 = vector.load %arg1[%c0_5, %c0_6] : memref<32x32xf32, #tpu.memory_space<vmem>>, vector<32x32xf32>
    %cst = arith.constant dense<0.000000e+00> : vector<32x128xf32>
    %4 = tpu.matmul %3, %0, %cst {dimension_numbers = #tpu.dot_dimension_numbers<[1], [0], [0], [1], [0, 0, 1, 1], [], []>} : vector<32x32xf32>, vector<32x128xf32>, vector<32x128xf32> -> vector<32x128xf32>
    %5 = vector.broadcast %2 : vector<1x128xf32> to vector<32x128xf32>
    %6 = arith.addf %4, %5 : vector<32x128xf32>
    %c0_7 = arith.constant 0 : index
    %c0_8 = arith.constant 0 : index
    %c0_9 = arith.constant 0 : index
    %7 = vector.load %arg2[%c0_7, %c0_8, %c0_9] : memref<2x4x32xf32, #tpu.memory_space<vmem>>, vector<1x4x32xf32>
    %8 = vector.shape_cast %7 : vector<1x4x32xf32> to vector<4x32xf32>
    %c0_10 = arith.constant 0 : index
    %c0_11 = arith.constant 0 : index
    %c0_12 = arith.constant 0 : index
    %9 = vector.load %arg3[%c0_10, %c0_11, %c0_12] : memref<2x4x32xf32, #tpu.memory_space<vmem>>, vector<1x4x32xf32>
    %10 = vector.shape_cast %9 : vector<1x4x32xf32> to vector<4x32xf32>
    %11 = vector.extract_strided_slice %6 {offsets = [0, 0], sizes = [4, 128], strides = [1, 1]} : vector<32x128xf32> to vector<4x128xf32>
    %cst_13 = arith.constant dense<0.000000e+00> : vector<4x128xf32>
    %12 = tpu.matmul %8, %1, %cst_13 {dimension_numbers = #tpu.dot_dimension_numbers<[1], [0], [0], [1], [0, 0, 1, 1], [], []>} : vector<4x32xf32>, vector<32x128xf32>, vector<4x128xf32> -> vector<4x128xf32>
    %13 = arith.addf %11, %12 : vector<4x128xf32>
    %14 = arith.negf %13 : vector<4x128xf32>
    %15 = math.exp %14 : vector<4x128xf32>
    %cst_14 = arith.constant 1.000000e+00 : f32
    %16 = vector.broadcast %cst_14 : f32 to vector<4x128xf32>
    %17 = arith.addf %16, %15 : vector<4x128xf32>
    %18 = arith.divf %16, %17 : vector<4x128xf32>
    %19 = math.tanh %13 : vector<4x128xf32>
    %20 = vector.extract_strided_slice %18 {offsets = [0, 0], sizes = [4, 32], strides = [1, 1]} : vector<4x128xf32> to vector<4x32xf32>
    %21 = vector.extract_strided_slice %18 {offsets = [0, 32], sizes = [4, 32], strides = [1, 1]} : vector<4x128xf32> to vector<4x32xf32>
    %22 = vector.extract_strided_slice %19 {offsets = [0, 64], sizes = [4, 32], strides = [1, 1]} : vector<4x128xf32> to vector<4x32xf32>
    %23 = vector.extract_strided_slice %18 {offsets = [0, 96], sizes = [4, 32], strides = [1, 1]} : vector<4x128xf32> to vector<4x32xf32>
    %24 = arith.mulf %21, %10 : vector<4x32xf32>
    %25 = arith.mulf %20, %22 : vector<4x32xf32>
    %26 = arith.addf %24, %25 : vector<4x32xf32>
    %27 = math.tanh %26 : vector<4x32xf32>
    %28 = arith.mulf %23, %27 : vector<4x32xf32>
    %c0_15 = arith.constant 0 : index
    %c0_16 = arith.constant 0 : index
    %29 = vector.load %arg10[%c0_15, %c0_16] : memref<32x32xf32, #tpu.memory_space<vmem>>, vector<4x32xf32>
    tpu.vector_store %arg10[%c0_15, %c0_16], %28 {strides = array<i32>} : memref<32x32xf32, #tpu.memory_space<vmem>>, vector<4x32xf32>,
    %30 = vector.extract_strided_slice %6 {offsets = [4, 0], sizes = [4, 128], strides = [1, 1]} : vector<32x128xf32> to vector<4x128xf32>
    %cst_17 = arith.constant dense<0.000000e+00> : vector<4x128xf32>
    %31 = tpu.matmul %28, %1, %cst_17 {dimension_numbers = #tpu.dot_dimension_numbers<[1], [0], [0], [1], [0, 0, 1, 1], [], []>} : vector<4x32xf32>, vector<32x128xf32>, vector<4x128xf32> -> vector<4x128xf32>
    %32 = arith.addf %30, %31 : vector<4x128xf32>
    %33 = arith.negf %32 : vector<4x128xf32>
    %34 = math.exp %33 : vector<4x128xf32>
    %cst_18 = arith.constant 1.000000e+00 : f32
    %35 = vector.broadcast %cst_18 : f32 to vector<4x128xf32>
    %36 = arith.addf %35, %34 : vector<4x128xf32>
    %37 = arith.divf %35, %36 : vector<4x128xf32>
    %38 = math.tanh %32 : vector<4x128xf32>
    %39 = vector.extract_strided_slice %37 {offsets = [0, 0], sizes = [4, 32], strides = [1, 1]} : vector<4x128xf32> to vector<4x32xf32>
    %40 = vector.extract_strided_slice %37 {offsets = [0, 32], sizes = [4, 32], strides = [1, 1]} : vector<4x128xf32> to vector<4x32xf32>
    %41 = vector.extract_strided_slice %38 {offsets = [0, 64], sizes = [4, 32], strides = [1, 1]} : vector<4x128xf32> to vector<4x32xf32>
    %42 = vector.extract_strided_slice %37 {offsets = [0, 96], sizes = [4, 32], strides = [1, 1]} : vector<4x128xf32> to vector<4x32xf32>
    %43 = arith.mulf %40, %26 : vector<4x32xf32>
    %44 = arith.mulf %39, %41 : vector<4x32xf32>
    %45 = arith.addf %43, %44 : vector<4x32xf32>
    %46 = math.tanh %45 : vector<4x32xf32>
    %47 = arith.mulf %42, %46 : vector<4x32xf32>
    %c4 = arith.constant 4 : index
    %c0_19 = arith.constant 0 : index
    %48 = vector.load %arg10[%c4, %c0_19] : memref<32x32xf32, #tpu.memory_space<vmem>>, vector<4x32xf32>
    tpu.vector_store %arg10[%c4, %c0_19], %47 {strides = array<i32>} : memref<32x32xf32, #tpu.memory_space<vmem>>, vector<4x32xf32>,
    %49 = vector.extract_strided_slice %6 {offsets = [8, 0], sizes = [4, 128], strides = [1, 1]} : vector<32x128xf32> to vector<4x128xf32>
    %cst_20 = arith.constant dense<0.000000e+00> : vector<4x128xf32>
    %50 = tpu.matmul %47, %1, %cst_20 {dimension_numbers = #tpu.dot_dimension_numbers<[1], [0], [0], [1], [0, 0, 1, 1], [], []>} : vector<4x32xf32>, vector<32x128xf32>, vector<4x128xf32> -> vector<4x128xf32>
    %51 = arith.addf %49, %50 : vector<4x128xf32>
    %52 = arith.negf %51 : vector<4x128xf32>
    %53 = math.exp %52 : vector<4x128xf32>
    %cst_21 = arith.constant 1.000000e+00 : f32
    %54 = vector.broadcast %cst_21 : f32 to vector<4x128xf32>
    %55 = arith.addf %54, %53 : vector<4x128xf32>
    %56 = arith.divf %54, %55 : vector<4x128xf32>
    %57 = math.tanh %51 : vector<4x128xf32>
    %58 = vector.extract_strided_slice %56 {offsets = [0, 0], sizes = [4, 32], strides = [1, 1]} : vector<4x128xf32> to vector<4x32xf32>
    %59 = vector.extract_strided_slice %56 {offsets = [0, 32], sizes = [4, 32], strides = [1, 1]} : vector<4x128xf32> to vector<4x32xf32>
    %60 = vector.extract_strided_slice %57 {offsets = [0, 64], sizes = [4, 32], strides = [1, 1]} : vector<4x128xf32> to vector<4x32xf32>
    %61 = vector.extract_strided_slice %56 {offsets = [0, 96], sizes = [4, 32], strides = [1, 1]} : vector<4x128xf32> to vector<4x32xf32>
    %62 = arith.mulf %59, %45 : vector<4x32xf32>
    %63 = arith.mulf %58, %60 : vector<4x32xf32>
    %64 = arith.addf %62, %63 : vector<4x32xf32>
    %65 = math.tanh %64 : vector<4x32xf32>
    %66 = arith.mulf %61, %65 : vector<4x32xf32>
    %c8 = arith.constant 8 : index
    %c0_22 = arith.constant 0 : index
    %67 = vector.load %arg10[%c8, %c0_22] : memref<32x32xf32, #tpu.memory_space<vmem>>, vector<4x32xf32>
    tpu.vector_store %arg10[%c8, %c0_22], %66 {strides = array<i32>} : memref<32x32xf32, #tpu.memory_space<vmem>>, vector<4x32xf32>,
    %68 = vector.extract_strided_slice %6 {offsets = [12, 0], sizes = [4, 128], strides = [1, 1]} : vector<32x128xf32> to vector<4x128xf32>
    %cst_23 = arith.constant dense<0.000000e+00> : vector<4x128xf32>
    %69 = tpu.matmul %66, %1, %cst_23 {dimension_numbers = #tpu.dot_dimension_numbers<[1], [0], [0], [1], [0, 0, 1, 1], [], []>} : vector<4x32xf32>, vector<32x128xf32>, vector<4x128xf32> -> vector<4x128xf32>
    %70 = arith.addf %68, %69 : vector<4x128xf32>
    %71 = arith.negf %70 : vector<4x128xf32>
    %72 = math.exp %71 : vector<4x128xf32>
    %cst_24 = arith.constant 1.000000e+00 : f32
    %73 = vector.broadcast %cst_24 : f32 to vector<4x128xf32>
    %74 = arith.addf %73, %72 : vector<4x128xf32>
    %75 = arith.divf %73, %74 : vector<4x128xf32>
    %76 = math.tanh %70 : vector<4x128xf32>
    %77 = vector.extract_strided_slice %75 {offsets = [0, 0], sizes = [4, 32], strides = [1, 1]} : vector<4x128xf32> to vector<4x32xf32>
    %78 = vector.extract_strided_slice %75 {offsets = [0, 32], sizes = [4, 32], strides = [1, 1]} : vector<4x128xf32> to vector<4x32xf32>
    %79 = vector.extract_strided_slice %76 {offsets = [0, 64], sizes = [4, 32], strides = [1, 1]} : vector<4x128xf32> to vector<4x32xf32>
    %80 = vector.extract_strided_slice %75 {offsets = [0, 96], sizes = [4, 32], strides = [1, 1]} : vector<4x128xf32> to vector<4x32xf32>
    %81 = arith.mulf %78, %64 : vector<4x32xf32>
    %82 = arith.mulf %77, %79 : vector<4x32xf32>
    %83 = arith.addf %81, %82 : vector<4x32xf32>
    %84 = math.tanh %83 : vector<4x32xf32>
    %85 = arith.mulf %80, %84 : vector<4x32xf32>
    %c12 = arith.constant 12 : index
    %c0_25 = arith.constant 0 : index
    %86 = vector.load %arg10[%c12, %c0_25] : memref<32x32xf32, #tpu.memory_space<vmem>>, vector<4x32xf32>
    tpu.vector_store %arg10[%c12, %c0_25], %85 {strides = array<i32>} : memref<32x32xf32, #tpu.memory_space<vmem>>, vector<4x32xf32>,
    %87 = vector.extract_strided_slice %6 {offsets = [16, 0], sizes = [4, 128], strides = [1, 1]} : vector<32x128xf32> to vector<4x128xf32>
    %cst_26 = arith.constant dense<0.000000e+00> : vector<4x128xf32>
    %88 = tpu.matmul %85, %1, %cst_26 {dimension_numbers = #tpu.dot_dimension_numbers<[1], [0], [0], [1], [0, 0, 1, 1], [], []>} : vector<4x32xf32>, vector<32x128xf32>, vector<4x128xf32> -> vector<4x128xf32>
    %89 = arith.addf %87, %88 : vector<4x128xf32>
    %90 = arith.negf %89 : vector<4x128xf32>
    %91 = math.exp %90 : vector<4x128xf32>
    %cst_27 = arith.constant 1.000000e+00 : f32
    %92 = vector.broadcast %cst_27 : f32 to vector<4x128xf32>
    %93 = arith.addf %92, %91 : vector<4x128xf32>
    %94 = arith.divf %92, %93 : vector<4x128xf32>
    %95 = math.tanh %89 : vector<4x128xf32>
    %96 = vector.extract_strided_slice %94 {offsets = [0, 0], sizes = [4, 32], strides = [1, 1]} : vector<4x128xf32> to vector<4x32xf32>
    %97 = vector.extract_strided_slice %94 {offsets = [0, 32], sizes = [4, 32], strides = [1, 1]} : vector<4x128xf32> to vector<4x32xf32>
    %98 = vector.extract_strided_slice %95 {offsets = [0, 64], sizes = [4, 32], strides = [1, 1]} : vector<4x128xf32> to vector<4x32xf32>
    %99 = vector.extract_strided_slice %94 {offsets = [0, 96], sizes = [4, 32], strides = [1, 1]} : vector<4x128xf32> to vector<4x32xf32>
    %100 = arith.mulf %97, %83 : vector<4x32xf32>
    %101 = arith.mulf %96, %98 : vector<4x32xf32>
    %102 = arith.addf %100, %101 : vector<4x32xf32>
    %103 = math.tanh %102 : vector<4x32xf32>
    %104 = arith.mulf %99, %103 : vector<4x32xf32>
    %c16 = arith.constant 16 : index
    %c0_28 = arith.constant 0 : index
    %105 = vector.load %arg10[%c16, %c0_28] : memref<32x32xf32, #tpu.memory_space<vmem>>, vector<4x32xf32>
    tpu.vector_store %arg10[%c16, %c0_28], %104 {strides = array<i32>} : memref<32x32xf32, #tpu.memory_space<vmem>>, vector<4x32xf32>,
    %106 = vector.extract_strided_slice %6 {offsets = [20, 0], sizes = [4, 128], strides = [1, 1]} : vector<32x128xf32> to vector<4x128xf32>
    %cst_29 = arith.constant dense<0.000000e+00> : vector<4x128xf32>
    %107 = tpu.matmul %104, %1, %cst_29 {dimension_numbers = #tpu.dot_dimension_numbers<[1], [0], [0], [1], [0, 0, 1, 1], [], []>} : vector<4x32xf32>, vector<32x128xf32>, vector<4x128xf32> -> vector<4x128xf32>
    %108 = arith.addf %106, %107 : vector<4x128xf32>
    %109 = arith.negf %108 : vector<4x128xf32>
    %110 = math.exp %109 : vector<4x128xf32>
    %cst_30 = arith.constant 1.000000e+00 : f32
    %111 = vector.broadcast %cst_30 : f32 to vector<4x128xf32>
    %112 = arith.addf %111, %110 : vector<4x128xf32>
    %113 = arith.divf %111, %112 : vector<4x128xf32>
    %114 = math.tanh %108 : vector<4x128xf32>
    %115 = vector.extract_strided_slice %113 {offsets = [0, 0], sizes = [4, 32], strides = [1, 1]} : vector<4x128xf32> to vector<4x32xf32>
    %116 = vector.extract_strided_slice %113 {offsets = [0, 32], sizes = [4, 32], strides = [1, 1]} : vector<4x128xf32> to vector<4x32xf32>
    %117 = vector.extract_strided_slice %114 {offsets = [0, 64], sizes = [4, 32], strides = [1, 1]} : vector<4x128xf32> to vector<4x32xf32>
    %118 = vector.extract_strided_slice %113 {offsets = [0, 96], sizes = [4, 32], strides = [1, 1]} : vector<4x128xf32> to vector<4x32xf32>
    %119 = arith.mulf %116, %102 : vector<4x32xf32>
    %120 = arith.mulf %115, %117 : vector<4x32xf32>
    %121 = arith.addf %119, %120 : vector<4x32xf32>
    %122 = math.tanh %121 : vector<4x32xf32>
    %123 = arith.mulf %118, %122 : vector<4x32xf32>
    %c20 = arith.constant 20 : index
    %c0_31 = arith.constant 0 : index
    %124 = vector.load %arg10[%c20, %c0_31] : memref<32x32xf32, #tpu.memory_space<vmem>>, vector<4x32xf32>
    tpu.vector_store %arg10[%c20, %c0_31], %123 {strides = array<i32>} : memref<32x32xf32, #tpu.memory_space<vmem>>, vector<4x32xf32>,
    %125 = vector.extract_strided_slice %6 {offsets = [24, 0], sizes = [4, 128], strides = [1, 1]} : vector<32x128xf32> to vector<4x128xf32>
    %cst_32 = arith.constant dense<0.000000e+00> : vector<4x128xf32>
    %126 = tpu.matmul %123, %1, %cst_32 {dimension_numbers = #tpu.dot_dimension_numbers<[1], [0], [0], [1], [0, 0, 1, 1], [], []>} : vector<4x32xf32>, vector<32x128xf32>, vector<4x128xf32> -> vector<4x128xf32>
    %127 = arith.addf %125, %126 : vector<4x128xf32>
    %128 = arith.negf %127 : vector<4x128xf32>
    %129 = math.exp %128 : vector<4x128xf32>
    %cst_33 = arith.constant 1.000000e+00 : f32
    %130 = vector.broadcast %cst_33 : f32 to vector<4x128xf32>
    %131 = arith.addf %130, %129 : vector<4x128xf32>
    %132 = arith.divf %130, %131 : vector<4x128xf32>
    %133 = math.tanh %127 : vector<4x128xf32>
    %134 = vector.extract_strided_slice %132 {offsets = [0, 0], sizes = [4, 32], strides = [1, 1]} : vector<4x128xf32> to vector<4x32xf32>
    %135 = vector.extract_strided_slice %132 {offsets = [0, 32], sizes = [4, 32], strides = [1, 1]} : vector<4x128xf32> to vector<4x32xf32>
    %136 = vector.extract_strided_slice %133 {offsets = [0, 64], sizes = [4, 32], strides = [1, 1]} : vector<4x128xf32> to vector<4x32xf32>
    %137 = vector.extract_strided_slice %132 {offsets = [0, 96], sizes = [4, 32], strides = [1, 1]} : vector<4x128xf32> to vector<4x32xf32>
    %138 = arith.mulf %135, %121 : vector<4x32xf32>
    %139 = arith.mulf %134, %136 : vector<4x32xf32>
    %140 = arith.addf %138, %139 : vector<4x32xf32>
    %141 = math.tanh %140 : vector<4x32xf32>
    %142 = arith.mulf %137, %141 : vector<4x32xf32>
    %c24 = arith.constant 24 : index
    %c0_34 = arith.constant 0 : index
    %143 = vector.load %arg10[%c24, %c0_34] : memref<32x32xf32, #tpu.memory_space<vmem>>, vector<4x32xf32>
    tpu.vector_store %arg10[%c24, %c0_34], %142 {strides = array<i32>} : memref<32x32xf32, #tpu.memory_space<vmem>>, vector<4x32xf32>,
    %144 = vector.extract_strided_slice %6 {offsets = [28, 0], sizes = [4, 128], strides = [1, 1]} : vector<32x128xf32> to vector<4x128xf32>
    %cst_35 = arith.constant dense<0.000000e+00> : vector<4x128xf32>
    %145 = tpu.matmul %142, %1, %cst_35 {dimension_numbers = #tpu.dot_dimension_numbers<[1], [0], [0], [1], [0, 0, 1, 1], [], []>} : vector<4x32xf32>, vector<32x128xf32>, vector<4x128xf32> -> vector<4x128xf32>
    %146 = arith.addf %144, %145 : vector<4x128xf32>
    %147 = arith.negf %146 : vector<4x128xf32>
    %148 = math.exp %147 : vector<4x128xf32>
    %cst_36 = arith.constant 1.000000e+00 : f32
    %149 = vector.broadcast %cst_36 : f32 to vector<4x128xf32>
    %150 = arith.addf %149, %148 : vector<4x128xf32>
    %151 = arith.divf %149, %150 : vector<4x128xf32>
    %152 = math.tanh %146 : vector<4x128xf32>
    %153 = vector.extract_strided_slice %151 {offsets = [0, 0], sizes = [4, 32], strides = [1, 1]} : vector<4x128xf32> to vector<4x32xf32>
    %154 = vector.extract_strided_slice %151 {offsets = [0, 32], sizes = [4, 32], strides = [1, 1]} : vector<4x128xf32> to vector<4x32xf32>
    %155 = vector.extract_strided_slice %152 {offsets = [0, 64], sizes = [4, 32], strides = [1, 1]} : vector<4x128xf32> to vector<4x32xf32>
    %156 = vector.extract_strided_slice %151 {offsets = [0, 96], sizes = [4, 32], strides = [1, 1]} : vector<4x128xf32> to vector<4x32xf32>
    %157 = arith.mulf %154, %140 : vector<4x32xf32>
    %158 = arith.mulf %153, %155 : vector<4x32xf32>
    %159 = arith.addf %157, %158 : vector<4x32xf32>
    %160 = math.tanh %159 : vector<4x32xf32>
    %161 = arith.mulf %156, %160 : vector<4x32xf32>
    %c28 = arith.constant 28 : index
    %c0_37 = arith.constant 0 : index
    %162 = vector.load %arg10[%c28, %c0_37] : memref<32x32xf32, #tpu.memory_space<vmem>>, vector<4x32xf32>
    tpu.vector_store %arg10[%c28, %c0_37], %161 {strides = array<i32>} : memref<32x32xf32, #tpu.memory_space<vmem>>, vector<4x32xf32>,
    %c0_38 = arith.constant 0 : index
    %c0_39 = arith.constant 0 : index
    %c0_40 = arith.constant 0 : index
    %163 = vector.load %arg8[%c0_38, %c0_39, %c0_40] : memref<2x4x32xf32, #tpu.memory_space<vmem>>, vector<1x4x32xf32>
    %164 = vector.shape_cast %163 : vector<1x4x32xf32> to vector<4x32xf32>
    %165 = vector.shape_cast %161 : vector<4x32xf32> to vector<1x4x32xf32>
    tpu.vector_store %arg8[%c0_38, %c0_39, %c0_40], %165 {strides = array<i32>} : memref<2x4x32xf32, #tpu.memory_space<vmem>>, vector<1x4x32xf32>,
    %c0_41 = arith.constant 0 : index
    %c0_42 = arith.constant 0 : index
    %c0_43 = arith.constant 0 : index
    %166 = vector.load %arg9[%c0_41, %c0_42, %c0_43] : memref<2x4x32xf32, #tpu.memory_space<vmem>>, vector<1x4x32xf32>
    %167 = vector.shape_cast %166 : vector<1x4x32xf32> to vector<4x32xf32>
    %168 = vector.shape_cast %159 : vector<4x32xf32> to vector<1x4x32xf32>
    tpu.vector_store %arg9[%c0_41, %c0_42, %c0_43], %168 {strides = array<i32>} : memref<2x4x32xf32, #tpu.memory_space<vmem>>, vector<1x4x32xf32>,
    %c0_44 = arith.constant 0 : index
    %c0_45 = arith.constant 0 : index
    %169 = vector.load %arg10[%c0_44, %c0_45] : memref<32x32xf32, #tpu.memory_space<vmem>>, vector<32x32xf32>
    %cst_46 = arith.constant dense<0.000000e+00> : vector<32x128xf32>
    %170 = tpu.matmul %169, %0, %cst_46 {dimension_numbers = #tpu.dot_dimension_numbers<[1], [0], [0], [1], [0, 0, 1, 1], [], []>} : vector<32x32xf32>, vector<32x128xf32>, vector<32x128xf32> -> vector<32x128xf32>
    %171 = vector.broadcast %2 : vector<1x128xf32> to vector<32x128xf32>
    %172 = arith.addf %170, %171 : vector<32x128xf32>
    %c1 = arith.constant 1 : index
    %c0_47 = arith.constant 0 : index
    %c0_48 = arith.constant 0 : index
    %173 = vector.load %arg2[%c1, %c0_47, %c0_48] : memref<2x4x32xf32, #tpu.memory_space<vmem>>, vector<1x4x32xf32>
    %174 = vector.shape_cast %173 : vector<1x4x32xf32> to vector<4x32xf32>
    %c1_49 = arith.constant 1 : index
    %c0_50 = arith.constant 0 : index
    %c0_51 = arith.constant 0 : index
    %175 = vector.load %arg3[%c1_49, %c0_50, %c0_51] : memref<2x4x32xf32, #tpu.memory_space<vmem>>, vector<1x4x32xf32>
    %176 = vector.shape_cast %175 : vector<1x4x32xf32> to vector<4x32xf32>
    %177 = vector.extract_strided_slice %172 {offsets = [0, 0], sizes = [4, 128], strides = [1, 1]} : vector<32x128xf32> to vector<4x128xf32>
    %cst_52 = arith.constant dense<0.000000e+00> : vector<4x128xf32>
    %178 = tpu.matmul %174, %1, %cst_52 {dimension_numbers = #tpu.dot_dimension_numbers<[1], [0], [0], [1], [0, 0, 1, 1], [], []>} : vector<4x32xf32>, vector<32x128xf32>, vector<4x128xf32> -> vector<4x128xf32>
    %179 = arith.addf %177, %178 : vector<4x128xf32>
    %180 = arith.negf %179 : vector<4x128xf32>
    %181 = math.exp %180 : vector<4x128xf32>
    %cst_53 = arith.constant 1.000000e+00 : f32
    %182 = vector.broadcast %cst_53 : f32 to vector<4x128xf32>
    %183 = arith.addf %182, %181 : vector<4x128xf32>
    %184 = arith.divf %182, %183 : vector<4x128xf32>
    %185 = math.tanh %179 : vector<4x128xf32>
    %186 = vector.extract_strided_slice %184 {offsets = [0, 0], sizes = [4, 32], strides = [1, 1]} : vector<4x128xf32> to vector<4x32xf32>
    %187 = vector.extract_strided_slice %184 {offsets = [0, 32], sizes = [4, 32], strides = [1, 1]} : vector<4x128xf32> to vector<4x32xf32>
    %188 = vector.extract_strided_slice %185 {offsets = [0, 64], sizes = [4, 32], strides = [1, 1]} : vector<4x128xf32> to vector<4x32xf32>
    %189 = vector.extract_strided_slice %184 {offsets = [0, 96], sizes = [4, 32], strides = [1, 1]} : vector<4x128xf32> to vector<4x32xf32>
    %190 = arith.mulf %187, %176 : vector<4x32xf32>
    %191 = arith.mulf %186, %188 : vector<4x32xf32>
    %192 = arith.addf %190, %191 : vector<4x32xf32>
    %193 = math.tanh %192 : vector<4x32xf32>
    %194 = arith.mulf %189, %193 : vector<4x32xf32>
    %c0_54 = arith.constant 0 : index
    %c0_55 = arith.constant 0 : index
    %195 = vector.load %arg7[%c0_54, %c0_55] : memref<32x32xf32, #tpu.memory_space<vmem>>, vector<4x32xf32>
    tpu.vector_store %arg7[%c0_54, %c0_55], %194 {strides = array<i32>} : memref<32x32xf32, #tpu.memory_space<vmem>>, vector<4x32xf32>,
    %196 = vector.extract_strided_slice %172 {offsets = [4, 0], sizes = [4, 128], strides = [1, 1]} : vector<32x128xf32> to vector<4x128xf32>
    %cst_56 = arith.constant dense<0.000000e+00> : vector<4x128xf32>
    %197 = tpu.matmul %194, %1, %cst_56 {dimension_numbers = #tpu.dot_dimension_numbers<[1], [0], [0], [1], [0, 0, 1, 1], [], []>} : vector<4x32xf32>, vector<32x128xf32>, vector<4x128xf32> -> vector<4x128xf32>
    %198 = arith.addf %196, %197 : vector<4x128xf32>
    %199 = arith.negf %198 : vector<4x128xf32>
    %200 = math.exp %199 : vector<4x128xf32>
    %cst_57 = arith.constant 1.000000e+00 : f32
    %201 = vector.broadcast %cst_57 : f32 to vector<4x128xf32>
    %202 = arith.addf %201, %200 : vector<4x128xf32>
    %203 = arith.divf %201, %202 : vector<4x128xf32>
    %204 = math.tanh %198 : vector<4x128xf32>
    %205 = vector.extract_strided_slice %203 {offsets = [0, 0], sizes = [4, 32], strides = [1, 1]} : vector<4x128xf32> to vector<4x32xf32>
    %206 = vector.extract_strided_slice %203 {offsets = [0, 32], sizes = [4, 32], strides = [1, 1]} : vector<4x128xf32> to vector<4x32xf32>
    %207 = vector.extract_strided_slice %204 {offsets = [0, 64], sizes = [4, 32], strides = [1, 1]} : vector<4x128xf32> to vector<4x32xf32>
    %208 = vector.extract_strided_slice %203 {offsets = [0, 96], sizes = [4, 32], strides = [1, 1]} : vector<4x128xf32> to vector<4x32xf32>
    %209 = arith.mulf %206, %192 : vector<4x32xf32>
    %210 = arith.mulf %205, %207 : vector<4x32xf32>
    %211 = arith.addf %209, %210 : vector<4x32xf32>
    %212 = math.tanh %211 : vector<4x32xf32>
    %213 = arith.mulf %208, %212 : vector<4x32xf32>
    %c4_58 = arith.constant 4 : index
    %c0_59 = arith.constant 0 : index
    %214 = vector.load %arg7[%c4_58, %c0_59] : memref<32x32xf32, #tpu.memory_space<vmem>>, vector<4x32xf32>
    tpu.vector_store %arg7[%c4_58, %c0_59], %213 {strides = array<i32>} : memref<32x32xf32, #tpu.memory_space<vmem>>, vector<4x32xf32>,
    %215 = vector.extract_strided_slice %172 {offsets = [8, 0], sizes = [4, 128], strides = [1, 1]} : vector<32x128xf32> to vector<4x128xf32>
    %cst_60 = arith.constant dense<0.000000e+00> : vector<4x128xf32>
    %216 = tpu.matmul %213, %1, %cst_60 {dimension_numbers = #tpu.dot_dimension_numbers<[1], [0], [0], [1], [0, 0, 1, 1], [], []>} : vector<4x32xf32>, vector<32x128xf32>, vector<4x128xf32> -> vector<4x128xf32>
    %217 = arith.addf %215, %216 : vector<4x128xf32>
    %218 = arith.negf %217 : vector<4x128xf32>
    %219 = math.exp %218 : vector<4x128xf32>
    %cst_61 = arith.constant 1.000000e+00 : f32
    %220 = vector.broadcast %cst_61 : f32 to vector<4x128xf32>
    %221 = arith.addf %220, %219 : vector<4x128xf32>
    %222 = arith.divf %220, %221 : vector<4x128xf32>
    %223 = math.tanh %217 : vector<4x128xf32>
    %224 = vector.extract_strided_slice %222 {offsets = [0, 0], sizes = [4, 32], strides = [1, 1]} : vector<4x128xf32> to vector<4x32xf32>
    %225 = vector.extract_strided_slice %222 {offsets = [0, 32], sizes = [4, 32], strides = [1, 1]} : vector<4x128xf32> to vector<4x32xf32>
    %226 = vector.extract_strided_slice %223 {offsets = [0, 64], sizes = [4, 32], strides = [1, 1]} : vector<4x128xf32> to vector<4x32xf32>
    %227 = vector.extract_strided_slice %222 {offsets = [0, 96], sizes = [4, 32], strides = [1, 1]} : vector<4x128xf32> to vector<4x32xf32>
    %228 = arith.mulf %225, %211 : vector<4x32xf32>
    %229 = arith.mulf %224, %226 : vector<4x32xf32>
    %230 = arith.addf %228, %229 : vector<4x32xf32>
    %231 = math.tanh %230 : vector<4x32xf32>
    %232 = arith.mulf %227, %231 : vector<4x32xf32>
    %c8_62 = arith.constant 8 : index
    %c0_63 = arith.constant 0 : index
    %233 = vector.load %arg7[%c8_62, %c0_63] : memref<32x32xf32, #tpu.memory_space<vmem>>, vector<4x32xf32>
    tpu.vector_store %arg7[%c8_62, %c0_63], %232 {strides = array<i32>} : memref<32x32xf32, #tpu.memory_space<vmem>>, vector<4x32xf32>,
    %234 = vector.extract_strided_slice %172 {offsets = [12, 0], sizes = [4, 128], strides = [1, 1]} : vector<32x128xf32> to vector<4x128xf32>
    %cst_64 = arith.constant dense<0.000000e+00> : vector<4x128xf32>
    %235 = tpu.matmul %232, %1, %cst_64 {dimension_numbers = #tpu.dot_dimension_numbers<[1], [0], [0], [1], [0, 0, 1, 1], [], []>} : vector<4x32xf32>, vector<32x128xf32>, vector<4x128xf32> -> vector<4x128xf32>
    %236 = arith.addf %234, %235 : vector<4x128xf32>
    %237 = arith.negf %236 : vector<4x128xf32>
    %238 = math.exp %237 : vector<4x128xf32>
    %cst_65 = arith.constant 1.000000e+00 : f32
    %239 = vector.broadcast %cst_65 : f32 to vector<4x128xf32>
    %240 = arith.addf %239, %238 : vector<4x128xf32>
    %241 = arith.divf %239, %240 : vector<4x128xf32>
    %242 = math.tanh %236 : vector<4x128xf32>
    %243 = vector.extract_strided_slice %241 {offsets = [0, 0], sizes = [4, 32], strides = [1, 1]} : vector<4x128xf32> to vector<4x32xf32>
    %244 = vector.extract_strided_slice %241 {offsets = [0, 32], sizes = [4, 32], strides = [1, 1]} : vector<4x128xf32> to vector<4x32xf32>
    %245 = vector.extract_strided_slice %242 {offsets = [0, 64], sizes = [4, 32], strides = [1, 1]} : vector<4x128xf32> to vector<4x32xf32>
    %246 = vector.extract_strided_slice %241 {offsets = [0, 96], sizes = [4, 32], strides = [1, 1]} : vector<4x128xf32> to vector<4x32xf32>
    %247 = arith.mulf %244, %230 : vector<4x32xf32>
    %248 = arith.mulf %243, %245 : vector<4x32xf32>
    %249 = arith.addf %247, %248 : vector<4x32xf32>
    %250 = math.tanh %249 : vector<4x32xf32>
    %251 = arith.mulf %246, %250 : vector<4x32xf32>
    %c12_66 = arith.constant 12 : index
    %c0_67 = arith.constant 0 : index
    %252 = vector.load %arg7[%c12_66, %c0_67] : memref<32x32xf32, #tpu.memory_space<vmem>>, vector<4x32xf32>
    tpu.vector_store %arg7[%c12_66, %c0_67], %251 {strides = array<i32>} : memref<32x32xf32, #tpu.memory_space<vmem>>, vector<4x32xf32>,
    %253 = vector.extract_strided_slice %172 {offsets = [16, 0], sizes = [4, 128], strides = [1, 1]} : vector<32x128xf32> to vector<4x128xf32>
    %cst_68 = arith.constant dense<0.000000e+00> : vector<4x128xf32>
    %254 = tpu.matmul %251, %1, %cst_68 {dimension_numbers = #tpu.dot_dimension_numbers<[1], [0], [0], [1], [0, 0, 1, 1], [], []>} : vector<4x32xf32>, vector<32x128xf32>, vector<4x128xf32> -> vector<4x128xf32>
    %255 = arith.addf %253, %254 : vector<4x128xf32>
    %256 = arith.negf %255 : vector<4x128xf32>
    %257 = math.exp %256 : vector<4x128xf32>
    %cst_69 = arith.constant 1.000000e+00 : f32
    %258 = vector.broadcast %cst_69 : f32 to vector<4x128xf32>
    %259 = arith.addf %258, %257 : vector<4x128xf32>
    %260 = arith.divf %258, %259 : vector<4x128xf32>
    %261 = math.tanh %255 : vector<4x128xf32>
    %262 = vector.extract_strided_slice %260 {offsets = [0, 0], sizes = [4, 32], strides = [1, 1]} : vector<4x128xf32> to vector<4x32xf32>
    %263 = vector.extract_strided_slice %260 {offsets = [0, 32], sizes = [4, 32], strides = [1, 1]} : vector<4x128xf32> to vector<4x32xf32>
    %264 = vector.extract_strided_slice %261 {offsets = [0, 64], sizes = [4, 32], strides = [1, 1]} : vector<4x128xf32> to vector<4x32xf32>
    %265 = vector.extract_strided_slice %260 {offsets = [0, 96], sizes = [4, 32], strides = [1, 1]} : vector<4x128xf32> to vector<4x32xf32>
    %266 = arith.mulf %263, %249 : vector<4x32xf32>
    %267 = arith.mulf %262, %264 : vector<4x32xf32>
    %268 = arith.addf %266, %267 : vector<4x32xf32>
    %269 = math.tanh %268 : vector<4x32xf32>
    %270 = arith.mulf %265, %269 : vector<4x32xf32>
    %c16_70 = arith.constant 16 : index
    %c0_71 = arith.constant 0 : index
    %271 = vector.load %arg7[%c16_70, %c0_71] : memref<32x32xf32, #tpu.memory_space<vmem>>, vector<4x32xf32>
    tpu.vector_store %arg7[%c16_70, %c0_71], %270 {strides = array<i32>} : memref<32x32xf32, #tpu.memory_space<vmem>>, vector<4x32xf32>,
    %272 = vector.extract_strided_slice %172 {offsets = [20, 0], sizes = [4, 128], strides = [1, 1]} : vector<32x128xf32> to vector<4x128xf32>
    %cst_72 = arith.constant dense<0.000000e+00> : vector<4x128xf32>
    %273 = tpu.matmul %270, %1, %cst_72 {dimension_numbers = #tpu.dot_dimension_numbers<[1], [0], [0], [1], [0, 0, 1, 1], [], []>} : vector<4x32xf32>, vector<32x128xf32>, vector<4x128xf32> -> vector<4x128xf32>
    %274 = arith.addf %272, %273 : vector<4x128xf32>
    %275 = arith.negf %274 : vector<4x128xf32>
    %276 = math.exp %275 : vector<4x128xf32>
    %cst_73 = arith.constant 1.000000e+00 : f32
    %277 = vector.broadcast %cst_73 : f32 to vector<4x128xf32>
    %278 = arith.addf %277, %276 : vector<4x128xf32>
    %279 = arith.divf %277, %278 : vector<4x128xf32>
    %280 = math.tanh %274 : vector<4x128xf32>
    %281 = vector.extract_strided_slice %279 {offsets = [0, 0], sizes = [4, 32], strides = [1, 1]} : vector<4x128xf32> to vector<4x32xf32>
    %282 = vector.extract_strided_slice %279 {offsets = [0, 32], sizes = [4, 32], strides = [1, 1]} : vector<4x128xf32> to vector<4x32xf32>
    %283 = vector.extract_strided_slice %280 {offsets = [0, 64], sizes = [4, 32], strides = [1, 1]} : vector<4x128xf32> to vector<4x32xf32>
    %284 = vector.extract_strided_slice %279 {offsets = [0, 96], sizes = [4, 32], strides = [1, 1]} : vector<4x128xf32> to vector<4x32xf32>
    %285 = arith.mulf %282, %268 : vector<4x32xf32>
    %286 = arith.mulf %281, %283 : vector<4x32xf32>
    %287 = arith.addf %285, %286 : vector<4x32xf32>
    %288 = math.tanh %287 : vector<4x32xf32>
    %289 = arith.mulf %284, %288 : vector<4x32xf32>
    %c20_74 = arith.constant 20 : index
    %c0_75 = arith.constant 0 : index
    %290 = vector.load %arg7[%c20_74, %c0_75] : memref<32x32xf32, #tpu.memory_space<vmem>>, vector<4x32xf32>
    tpu.vector_store %arg7[%c20_74, %c0_75], %289 {strides = array<i32>} : memref<32x32xf32, #tpu.memory_space<vmem>>, vector<4x32xf32>,
    %291 = vector.extract_strided_slice %172 {offsets = [24, 0], sizes = [4, 128], strides = [1, 1]} : vector<32x128xf32> to vector<4x128xf32>
    %cst_76 = arith.constant dense<0.000000e+00> : vector<4x128xf32>
    %292 = tpu.matmul %289, %1, %cst_76 {dimension_numbers = #tpu.dot_dimension_numbers<[1], [0], [0], [1], [0, 0, 1, 1], [], []>} : vector<4x32xf32>, vector<32x128xf32>, vector<4x128xf32> -> vector<4x128xf32>
    %293 = arith.addf %291, %292 : vector<4x128xf32>
    %294 = arith.negf %293 : vector<4x128xf32>
    %295 = math.exp %294 : vector<4x128xf32>
    %cst_77 = arith.constant 1.000000e+00 : f32
    %296 = vector.broadcast %cst_77 : f32 to vector<4x128xf32>
    %297 = arith.addf %296, %295 : vector<4x128xf32>
    %298 = arith.divf %296, %297 : vector<4x128xf32>
    %299 = math.tanh %293 : vector<4x128xf32>
    %300 = vector.extract_strided_slice %298 {offsets = [0, 0], sizes = [4, 32], strides = [1, 1]} : vector<4x128xf32> to vector<4x32xf32>
    %301 = vector.extract_strided_slice %298 {offsets = [0, 32], sizes = [4, 32], strides = [1, 1]} : vector<4x128xf32> to vector<4x32xf32>
    %302 = vector.extract_strided_slice %299 {offsets = [0, 64], sizes = [4, 32], strides = [1, 1]} : vector<4x128xf32> to vector<4x32xf32>
    %303 = vector.extract_strided_slice %298 {offsets = [0, 96], sizes = [4, 32], strides = [1, 1]} : vector<4x128xf32> to vector<4x32xf32>
    %304 = arith.mulf %301, %287 : vector<4x32xf32>
    %305 = arith.mulf %300, %302 : vector<4x32xf32>
    %306 = arith.addf %304, %305 : vector<4x32xf32>
    %307 = math.tanh %306 : vector<4x32xf32>
    %308 = arith.mulf %303, %307 : vector<4x32xf32>
    %c24_78 = arith.constant 24 : index
    %c0_79 = arith.constant 0 : index
    %309 = vector.load %arg7[%c24_78, %c0_79] : memref<32x32xf32, #tpu.memory_space<vmem>>, vector<4x32xf32>
    tpu.vector_store %arg7[%c24_78, %c0_79], %308 {strides = array<i32>} : memref<32x32xf32, #tpu.memory_space<vmem>>, vector<4x32xf32>,
    %310 = vector.extract_strided_slice %172 {offsets = [28, 0], sizes = [4, 128], strides = [1, 1]} : vector<32x128xf32> to vector<4x128xf32>
    %cst_80 = arith.constant dense<0.000000e+00> : vector<4x128xf32>
    %311 = tpu.matmul %308, %1, %cst_80 {dimension_numbers = #tpu.dot_dimension_numbers<[1], [0], [0], [1], [0, 0, 1, 1], [], []>} : vector<4x32xf32>, vector<32x128xf32>, vector<4x128xf32> -> vector<4x128xf32>
    %312 = arith.addf %310, %311 : vector<4x128xf32>
    %313 = arith.negf %312 : vector<4x128xf32>
    %314 = math.exp %313 : vector<4x128xf32>
    %cst_81 = arith.constant 1.000000e+00 : f32
    %315 = vector.broadcast %cst_81 : f32 to vector<4x128xf32>
    %316 = arith.addf %315, %314 : vector<4x128xf32>
    %317 = arith.divf %315, %316 : vector<4x128xf32>
    %318 = math.tanh %312 : vector<4x128xf32>
    %319 = vector.extract_strided_slice %317 {offsets = [0, 0], sizes = [4, 32], strides = [1, 1]} : vector<4x128xf32> to vector<4x32xf32>
    %320 = vector.extract_strided_slice %317 {offsets = [0, 32], sizes = [4, 32], strides = [1, 1]} : vector<4x128xf32> to vector<4x32xf32>
    %321 = vector.extract_strided_slice %318 {offsets = [0, 64], sizes = [4, 32], strides = [1, 1]} : vector<4x128xf32> to vector<4x32xf32>
    %322 = vector.extract_strided_slice %317 {offsets = [0, 96], sizes = [4, 32], strides = [1, 1]} : vector<4x128xf32> to vector<4x32xf32>
    %323 = arith.mulf %320, %306 : vector<4x32xf32>
    %324 = arith.mulf %319, %321 : vector<4x32xf32>
    %325 = arith.addf %323, %324 : vector<4x32xf32>
    %326 = math.tanh %325 : vector<4x32xf32>
    %327 = arith.mulf %322, %326 : vector<4x32xf32>
    %c28_82 = arith.constant 28 : index
    %c0_83 = arith.constant 0 : index
    %328 = vector.load %arg7[%c28_82, %c0_83] : memref<32x32xf32, #tpu.memory_space<vmem>>, vector<4x32xf32>
    tpu.vector_store %arg7[%c28_82, %c0_83], %327 {strides = array<i32>} : memref<32x32xf32, #tpu.memory_space<vmem>>, vector<4x32xf32>,
    %c1_84 = arith.constant 1 : index
    %c0_85 = arith.constant 0 : index
    %c0_86 = arith.constant 0 : index
    %329 = vector.load %arg8[%c1_84, %c0_85, %c0_86] : memref<2x4x32xf32, #tpu.memory_space<vmem>>, vector<1x4x32xf32>
    %330 = vector.shape_cast %329 : vector<1x4x32xf32> to vector<4x32xf32>
    %331 = vector.shape_cast %327 : vector<4x32xf32> to vector<1x4x32xf32>
    tpu.vector_store %arg8[%c1_84, %c0_85, %c0_86], %331 {strides = array<i32>} : memref<2x4x32xf32, #tpu.memory_space<vmem>>, vector<1x4x32xf32>,
    %c1_87 = arith.constant 1 : index
    %c0_88 = arith.constant 0 : index
    %c0_89 = arith.constant 0 : index
    %332 = vector.load %arg9[%c1_87, %c0_88, %c0_89] : memref<2x4x32xf32, #tpu.memory_space<vmem>>, vector<1x4x32xf32>
    %333 = vector.shape_cast %332 : vector<1x4x32xf32> to vector<4x32xf32>
    %334 = vector.shape_cast %325 : vector<4x32xf32> to vector<1x4x32xf32>
    tpu.vector_store %arg9[%c1_87, %c0_88, %c0_89], %334 {strides = array<i32>} : memref<2x4x32xf32, #tpu.memory_space<vmem>>, vector<1x4x32xf32>,
    return
  }
  func.func @transform_0(%arg0: i32) -> (i32, i32) {
    %c0_i32 = arith.constant 0 : i32
    %c0_i32_0 = arith.constant 0 : i32
    %c0_i32_1 = arith.constant 0 : i32
    return %c0_i32, %c0_i32_0 : i32, i32
  }
  func.func @transform_1(%arg0: i32) -> (i32, i32, i32) {
    %c0_i32 = arith.constant 0 : i32
    %c0_i32_0 = arith.constant 0 : i32
    %c0_i32_1 = arith.constant 0 : i32
    %c0_i32_2 = arith.constant 0 : i32
    return %c0_i32, %c0_i32_0, %c0_i32_1 : i32, i32, i32
  }
  func.func @transform_2(%arg0: i32) -> (i32, i32, i32) {
    %c0_i32 = arith.constant 0 : i32
    %c0_i32_0 = arith.constant 0 : i32
    %c0_i32_1 = arith.constant 0 : i32
    %c0_i32_2 = arith.constant 0 : i32
    return %c0_i32, %c0_i32_0, %c0_i32_1 : i32, i32, i32
  }
  func.func @transform_3(%arg0: i32) -> (i32, i32) {
    %c0_i32 = arith.constant 0 : i32
    %c0_i32_0 = arith.constant 0 : i32
    %c0_i32_1 = arith.constant 0 : i32
    return %c0_i32, %c0_i32_0 : i32, i32
  }
  func.func @transform_4(%arg0: i32) -> (i32, i32) {
    %c0_i32 = arith.constant 0 : i32
    %c0_i32_0 = arith.constant 0 : i32
    %c0_i32_1 = arith.constant 0 : i32
    return %c0_i32, %c0_i32_0 : i32, i32
  }
  func.func @transform_5(%arg0: i32) -> (i32, i32) {
    %c0_i32 = arith.constant 0 : i32
    %c0_i32_0 = arith.constant 0 : i32
    %c0_i32_1 = arith.constant 0 : i32
    return %c0_i32, %c0_i32_0 : i32, i32
  }
  func.func @transform_6(%arg0: i32) -> (i32, i32) {
    %c0_i32 = arith.constant 0 : i32
    %c0_i32_0 = arith.constant 0 : i32
    %c0_i32_1 = arith.constant 0 : i32
    return %c0_i32, %c0_i32_0 : i32, i32
  }
  func.func @transform_7(%arg0: i32) -> (i32, i32, i32) {
    %c0_i32 = arith.constant 0 : i32
    %c0_i32_0 = arith.constant 0 : i32
    %c0_i32_1 = arith.constant 0 : i32
    %c0_i32_2 = arith.constant 0 : i32
    return %c0_i32, %c0_i32_0, %c0_i32_1 : i32, i32, i32
  }
  func.func @transform_8(%arg0: i32) -> (i32, i32, i32) {
    %c0_i32 = arith.constant 0 : i32
    %c0_i32_0 = arith.constant 0 : i32
    %c0_i32_1 = arith.constant 0 : i32
    %c0_i32_2 = arith.constant 0 : i32
    return %c0_i32, %c0_i32_0, %c0_i32_1 : i32, i32, i32
  }
}

</mosaic_0001>

<llo_original>
// kernel: lstm_forward.1
$region0: #{lstm_forward.1}
  #allocation0 [shape = 'u32[]', space=smem, size = 0x4, offset = 0x4, fixed_abs, tag = 'smem constant byte address 0x4 - core index']
  #allocation1 [shape = 'u32[144,128]{1,0:T(1,128)}', space=vmem, size = 0x12000, scoped, tag = 'internal scratch']
  #allocation2 [shape = 'f32[32,32]{1,0:T(8,128)}', space=vmem, size = 0x4000, scoped, tag = 'scratch operand']
  %s0 = inlined_call_operand.hbm [shape: f32[32,32], index: 0, kind: input, shape index: {}]
  %s1 = inlined_call_operand.hbm [shape: f32[2,4,32], index: 1, kind: input, shape index: {}]
  %s2 = inlined_call_operand.vmem [shape: f32[2,4,32], index: 2, kind: input, shape index: {}]
  %s3 = inlined_call_operand.hbm [shape: f32[32,128], index: 3, kind: input, shape index: {}]
  %s4 = inlined_call_operand.hbm [shape: f32[32,128], index: 4, kind: input, shape index: {}]
  %s5 = inlined_call_operand.vmem [shape: f32[1,128], index: 5, kind: input, shape index: {}]
  %s6 = inlined_call_operand.hbm [shape: f32[32,32], index: 6, kind: output, shape index: {0}]
  %s7 = inlined_call_operand.hbm [shape: f32[2,4,32], index: 7, kind: output, shape index: {1}]
  %s8 = inlined_call_operand.hbm [shape: f32[2,4,32], index: 8, kind: output, shape index: {2}]
  %9 = xla_tuple %s6, %s7, %s8
  %s10 = sld [smem:[#allocation0]]
  $region66: #{lstm_forward.1} parent=0
    _
  %s12 = ssub.s32 1, %s10
  %s13 = scalar_select 0, %s12, %s10
  $region1: #{lstm_forward.1} parent=0
    #allocation3 [shape = 'u8[16384]{0}', space=vmem, size = 0x4000, scoped, tag = 'input window, operand 0, single buffered']
    #allocation4 [shape = 's32[1]{0}', space=sflag, size = 0x4, scoped, tag = 'scoped memory for lstm_forward.1']
    #allocation5 [shape = 's32[1]{0}', space=sflag, size = 0x4, scoped, tag = 'scoped memory for lstm_forward.1']
    #allocation6 [shape = 'u8[4096]{0}', space=vmem, size = 0x1000, scoped, tag = 'input window, operand 1, single buffered']
    #allocation7 [shape = 's32[1]{0}', space=sflag, size = 0x4, scoped, tag = 'scoped memory for lstm_forward.1']
    #allocation8 [shape = 'u8[16384]{0}', space=vmem, size = 0x4000, scoped, tag = 'input window, operand 3, single buffered']
    #allocation9 [shape = 'u8[16384]{0}', space=vmem, size = 0x4000, scoped, tag = 'input window, operand 4, single buffered']
    #allocation10 [shape = 's32[1]{0}', space=sflag, size = 0x4, scoped, tag = 'scoped memory for lstm_forward.1']
    #allocation11 [shape = 'u8[16384]{0}', space=vmem, size = 0x4000, scoped, tag = 'output window, operand 0, single buffered']
    #allocation12 [shape = 'u8[4096]{0}', space=vmem, size = 0x1000, scoped, tag = 'output window, operand 1, single buffered']
    #allocation13 [shape = 's32[1]{0}', space=sflag, size = 0x4, scoped, tag = 'scoped memory for lstm_forward.1']
    #allocation14 [shape = 'u8[4096]{0}', space=vmem, size = 0x1000, scoped, tag = 'output window, operand 2, single buffered']
    %14 = vsyncpa [#allocation4], 0
    %15 = vsyncpa [#allocation7], 0
    %16 = vsyncpa [#allocation10], 0
    %17 = vsyncpa [#allocation5], 0
    %18 = vsyncpa [#allocation13], 0
    // Predicated region
    $region2: #{lstm_forward.1} parent=1 // pred_check
      _
    $region3: #{lstm_forward.1} parent=1 // pred_check_branch
      %20 = sbr.rel (0) target = $region5
    $region4: #{lstm_forward.1} parent=1 // pred_region
      %s22 = ssub.s32 512, 512
      %23 = vsyncadd [#allocation4], %s22
      %s24 = sshll.u32 [#allocation3], 4
      %s25 = int_to_ptr.vmem [resolvable:$true] %s24
      %30 = dma.hbm_to_vmem [thread:$0]  %s0, 512, %s25, [#allocation4], 128, 128, 8
    $region5: #{lstm_forward.1} parent=1 // pred_fallthru
      _
    // Predicated region
    $region6: #{lstm_forward.1} parent=1 // pred_check
      _
    $region7: #{lstm_forward.1} parent=1 // pred_check_branch
      %32 = sbr.rel (0) target = $region9
    $region8: #{lstm_forward.1} parent=1 // pred_region
      %s34 = ssub.s32 128, 128
      %35 = vsyncadd [#allocation7], %s34
      %s36 = sshll.u32 [#allocation6], 4
      %s37 = int_to_ptr.vmem [resolvable:$true] %s36
      %42 = dma.hbm_to_vmem [thread:$0]  %s1, 128, %s37, [#allocation7], 64, 64, 4
    $region9: #{lstm_forward.1} parent=1 // pred_fallthru
      _
    // Predicated region
    $region10: #{lstm_forward.1} parent=1 // pred_check
      _
    $region11: #{lstm_forward.1} parent=1 // pred_check_branch
      %44 = sbr.rel (0) target = $region13
    $region12: #{lstm_forward.1} parent=1 // pred_region
      _
    $region13: #{lstm_forward.1} parent=1 // pred_fallthru
      _
    // Predicated region
    $region14: #{lstm_forward.1} parent=1 // pred_check
      _
    $region15: #{lstm_forward.1} parent=1 // pred_check_branch
      %46 = sbr.rel (0) target = $region17
    $region16: #{lstm_forward.1} parent=1 // pred_region
      %s48 = ssub.s32 512, 512
      %49 = vsyncadd [#allocation7], %s48
      %s50 = sshll.u32 [#allocation8], 4
      %s51 = int_to_ptr.vmem [resolvable:$true] %s50
      %56 = dma.hbm_to_vmem [thread:$0]  %s3, 512, %s51, [#allocation7], 128, 128, 8
    $region17: #{lstm_forward.1} parent=1 // pred_fallthru
      _
    // Predicated region
    $region18: #{lstm_forward.1} parent=1 // pred_check
      _
    $region19: #{lstm_forward.1} parent=1 // pred_check_branch
      %58 = sbr.rel (0) target = $region21
    $region20: #{lstm_forward.1} parent=1 // pred_region
      %s60 = ssub.s32 512, 512
      %61 = vsyncadd [#allocation10], %s60
      %s62 = sshll.u32 [#allocation9], 4
      %s63 = int_to_ptr.vmem [resolvable:$true] %s62
      %68 = dma.hbm_to_vmem [thread:$0]  %s4, 512, %s63, [#allocation10], 128, 128, 8
    $region21: #{lstm_forward.1} parent=1 // pred_fallthru
      _
    // Predicated region
    $region22: #{lstm_forward.1} parent=1 // pred_check
      _
    $region23: #{lstm_forward.1} parent=1 // pred_check_branch
      %70 = sbr.rel (0) target = $region25
    $region24: #{lstm_forward.1} parent=1 // pred_region
      _
    $region25: #{lstm_forward.1} parent=1 // pred_fallthru
      _
    // Predicated region
    $region26: #{lstm_forward.1} parent=1 // pred_check
      _
    $region27: #{lstm_forward.1} parent=1 // pred_check_branch
      %72 = sbr.rel (0) target = $region29
    $region28: #{lstm_forward.1} parent=1 // pred_region
      %73 = dma.done [#allocation4], 512
    $region29: #{lstm_forward.1} parent=1 // pred_fallthru
      _
    // Predicated region
    $region30: #{lstm_forward.1} parent=1 // pred_check
      _
    $region31: #{lstm_forward.1} parent=1 // pred_check_branch
      %75 = sbr.rel (0) target = $region33
    $region32: #{lstm_forward.1} parent=1 // pred_region
      %76 = dma.done [#allocation7], 128
    $region33: #{lstm_forward.1} parent=1 // pred_fallthru
      _
    // Predicated region
    $region34: #{lstm_forward.1} parent=1 // pred_check
      _
    $region35: #{lstm_forward.1} parent=1 // pred_check_branch
      %78 = sbr.rel (0) target = $region37
    $region36: #{lstm_forward.1} parent=1 // pred_region
      %79 = dma.done [#allocation7], 512
    $region37: #{lstm_forward.1} parent=1 // pred_fallthru
      _
    // Predicated region
    $region38: #{lstm_forward.1} parent=1 // pred_check
      _
    $region39: #{lstm_forward.1} parent=1 // pred_check_branch
      %81 = sbr.rel (0) target = $region41
    $region40: #{lstm_forward.1} parent=1 // pred_region
      %82 = dma.done [#allocation10], 512
    $region41: #{lstm_forward.1} parent=1 // pred_fallthru
      _
    %v83 = vld [vmem:[#allocation8] sm:$0xff]
    %v84 = vld [vmem:[#allocation8 + $0x8] sm:$0xff]
    %v85 = vld [vmem:[#allocation8 + $0x10] sm:$0xff]
    %v86 = vld [vmem:[#allocation8 + $0x18] sm:$0xff]
    %v87 = vld [vmem:[#allocation9] sm:$0xff]
    %v88 = vld [vmem:[#allocation9 + $0x8] sm:$0xff]
    %v89 = vld [vmem:[#allocation9 + $0x10] sm:$0xff]
    %v90 = vld [vmem:[#allocation9 + $0x18] sm:$0xff]
    %v91 = vld [vmem:[%s5] sm:$0x1]
    %v92 = vld [vmem:[#allocation3] sm:$0xff]
    %v93 = vld [vmem:[#allocation3 + $0x8] sm:$0xff]
    %v94 = vld [vmem:[#allocation3 + $0x10] sm:$0xff]
    %v95 = vld [vmem:[#allocation3 + $0x18] sm:$0xff]
    %v97 = vlaneseq
    %v98 = vshrl.u32 %v97, 7
    %v99 = vsub.s32 0, %v98
    %v100 = vrot.slane %v91, %v99
    %vm102 = vcmask 261120
    %v104 = vsel %vm102, %v92, 0
    %v107 = vsel %vm102, %v93, 0
    %v110 = vsel %vm102, %v94, 0
    %v113 = vsel %vm102, %v95, 0
    %115 = vmatprep.subr.mxu0 0.0
    %116 = vmatpush1.msra.mxu0 0.0
    %117 = vmatprep.subr.mxu0 0.0
    %118 = vmatpush1.msra.mxu0 0.0
    %119 = vmatprep.subr.mxu0 0.0
    %120 = vmatpush1.msra.mxu0 0.0
    %121 = vmatprep.subr.mxu0 0.0
    %122 = vmatpush1.msra.mxu0 0.0
    %123 = vmatprep.subr.mxu0 0.0
    %124 = vmatpush1.msra.mxu0 0.0
    %125 = vmatprep.subr.mxu0 0.0
    %126 = vmatpush1.msra.mxu0 0.0
    %127 = vmatprep.subr.mxu0 0.0
    %128 = vmatpush1.msra.mxu0 0.0
    %129 = vmatprep.subr.mxu0 0.0
    %130 = vmatpush1.msra.mxu0 0.0
    %131 = vmatprep.subr.mxu0 0.0
    %132 = vmatpush1.msra.mxu0 0.0
    %133 = vmatprep.subr.mxu0 0.0
    %134 = vmatpush1.msra.mxu0 0.0
    %135 = vmatprep.subr.mxu0 0.0
    %136 = vmatpush1.msra.mxu0 0.0
    %137 = vmatprep.subr.mxu0 0.0
    %138 = vmatpush1.msra.mxu0 0.0
    %139 = vmatprep.subr.mxu0 0.0
    %140 = vmatpush1.msra.mxu0 %v86
    %141 = vmatprep.subr.mxu0 0.0
    %142 = vmatpush1.msra.mxu0 %v85
    %143 = vmatprep.subr.mxu0 0.0
    %144 = vmatpush1.msra.mxu0 %v84
    %145 = vmatprep.subr.mxu0 0.0
    %146 = vmatpush1.msra.mxu0 %v83
    %147 = vmatprep.subr.mxu0 0.0
    %148 = vmatpush2.msra.mxu0 0.0
    %149 = vmatprep.subr.mxu0 0.0
    %150 = vmatpush2.msra.mxu0 0.0
    %151 = vmatprep.subr.mxu0 0.0
    %152 = vmatpush2.msra.mxu0 0.0
    %153 = vmatprep.subr.mxu0 0.0
    %154 = vmatpush2.msra.mxu0 0.0
    %155 = vmatprep.subr.mxu0 0.0
    %156 = vmatpush2.msra.mxu0 0.0
    %157 = vmatprep.subr.mxu0 0.0
    %158 = vmatpush2.msra.mxu0 0.0
    %159 = vmatprep.subr.mxu0 0.0
    %160 = vmatpush2.msra.mxu0 0.0
    %161 = vmatprep.subr.mxu0 0.0
    %162 = vmatpush2.msra.mxu0 0.0
    %163 = vmatprep.subr.mxu0 0.0
    %164 = vmatpush2.msra.mxu0 0.0
    %165 = vmatprep.subr.mxu0 0.0
    %166 = vmatpush2.msra.mxu0 0.0
    %167 = vmatprep.subr.mxu0 0.0
    %168 = vmatpush2.msra.mxu0 0.0
    %169 = vmatprep.subr.mxu0 0.0
    %170 = vmatpush2.msra.mxu0 0.0
    %171 = vmatprep.subr.mxu0 0.0
    %172 = vmatpush2.msra.mxu0 0.0
    %173 = vmatprep.subr.mxu0 0.0
    %174 = vmatpush2.msra.mxu0 0.0
    %175 = vmatprep.subr.mxu0 0.0
    %176 = vmatpush2.msra.mxu0 0.0
    %177 = vmatprep.subr.mxu0 0.0
    %178 = vmatpush2.msra.mxu0 0.0
    %179 = vmatprep.mubr.f32.mxu0 0.0
    %180 = vmatmul.mubr.f32.gmra.mxu0 %v104
    %v181 = vpop.f32.mrf.mxu0
    %v182 = vadd.f32 %v100, %v181
    %v183 = vpop.f32.mrf.mxu0
    %184 = vmatprep.mubr.f32.mxu0 0.0
    %185 = vmatmul.mubr.f32.gmra.mxu0 %v107
    %v186 = vpop.f32.mrf.mxu0
    %v187 = vadd.f32 %v100, %v186
    %v188 = vpop.f32.mrf.mxu0
    %189 = vmatprep.mubr.f32.mxu0 0.0
    %190 = vmatmul.mubr.f32.gmra.mxu0 %v110
    %v191 = vpop.f32.mrf.mxu0
    %v192 = vadd.f32 %v100, %v191
    %v193 = vpop.f32.mrf.mxu0
    %194 = vmatprep.mubr.f32.mxu0 0.0
    %195 = vmatmul.mubr.f32.gmra.mxu0 %v113
    %v196 = vpop.f32.mrf.mxu0
    %v197 = vadd.f32 %v100, %v196
    %v198 = vpop.f32.mrf.mxu0
    %199 = vdwg.mxu0
    %v200 = vld [vmem:[#allocation6] sm:$0xf]
    %v201 = vld [vmem:[%s2] sm:$0xf]
    %v203 = vsel %vm102, %v200, 0
    %205 = vmatprep.subr.mxu0 0.0
    %206 = vmatpush1.msra.mxu0 0.0
    %207 = vmatprep.subr.mxu0 0.0
    %208 = vmatpush1.msra.mxu0 0.0
    %209 = vmatprep.subr.mxu0 0.0
    %210 = vmatpush1.msra.mxu0 0.0
    %211 = vmatprep.subr.mxu0 0.0
    %212 = vmatpush1.msra.mxu0 0.0
    %213 = vmatprep.subr.mxu0 0.0
    %214 = vmatpush1.msra.mxu0 0.0
    %215 = vmatprep.subr.mxu0 0.0
    %216 = vmatpush1.msra.mxu0 0.0
    %217 = vmatprep.subr.mxu0 0.0
    %218 = vmatpush1.msra.mxu0 0.0
    %219 = vmatprep.subr.mxu0 0.0
    %220 = vmatpush1.msra.mxu0 0.0
    %221 = vmatprep.subr.mxu0 0.0
    %222 = vmatpush1.msra.mxu0 0.0
    %223 = vmatprep.subr.mxu0 0.0
    %224 = vmatpush1.msra.mxu0 0.0
    %225 = vmatprep.subr.mxu0 0.0
    %226 = vmatpush1.msra.mxu0 0.0
    %227 = vmatprep.subr.mxu0 0.0
    %228 = vmatpush1.msra.mxu0 0.0
    %229 = vmatprep.subr.mxu0 0.0
    %230 = vmatpush1.msra.mxu0 %v90
    %231 = vmatprep.subr.mxu0 0.0
    %232 = vmatpush1.msra.mxu0 %v89
    %233 = vmatprep.subr.mxu0 0.0
    %234 = vmatpush1.msra.mxu0 %v88
    %235 = vmatprep.subr.mxu0 0.0
    %236 = vmatpush1.msra.mxu0 %v87
    %237 = vmatprep.subr.mxu0 0.0
    %238 = vmatpush2.msra.mxu0 0.0
    %239 = vmatprep.subr.mxu0 0.0
    %240 = vmatpush2.msra.mxu0 0.0
    %241 = vmatprep.subr.mxu0 0.0
    %242 = vmatpush2.msra.mxu0 0.0
    %243 = vmatprep.subr.mxu0 0.0
    %244 = vmatpush2.msra.mxu0 0.0
    %245 = vmatprep.subr.mxu0 0.0
    %246 = vmatpush2.msra.mxu0 0.0
    %247 = vmatprep.subr.mxu0 0.0
    %248 = vmatpush2.msra.mxu0 0.0
    %249 = vmatprep.subr.mxu0 0.0
    %250 = vmatpush2.msra.mxu0 0.0
    %251 = vmatprep.subr.mxu0 0.0
    %252 = vmatpush2.msra.mxu0 0.0
    %253 = vmatprep.subr.mxu0 0.0
    %254 = vmatpush2.msra.mxu0 0.0
    %255 = vmatprep.subr.mxu0 0.0
    %256 = vmatpush2.msra.mxu0 0.0
    %257 = vmatprep.subr.mxu0 0.0
    %258 = vmatpush2.msra.mxu0 0.0
    %259 = vmatprep.subr.mxu0 0.0
    %260 = vmatpush2.msra.mxu0 0.0
    %261 = vmatprep.subr.mxu0 0.0
    %262 = vmatpush2.msra.mxu0 0.0
    %263 = vmatprep.subr.mxu0 0.0
    %264 = vmatpush2.msra.mxu0 0.0
    %265 = vmatprep.subr.mxu0 0.0
    %266 = vmatpush2.msra.mxu0 0.0
    %267 = vmatprep.subr.mxu0 0.0
    %268 = vmatpush2.msra.mxu0 0.0
    %269 = vmatprep.mubr.f32.mxu0 0.0
    %270 = vmatmul.mubr.f32.gmra.mxu0 %v203
    %v271 = vpop.f32.mrf.mxu0
    %v272 = vadd.f32 0.0, %v271
    %v273 = vpop.f32.mrf.mxu0
    %274 = vdwg.mxu0
    %v275 = vadd.f32 %v182, %v272
    %v276 = vxor.u32 %v275, 2147483648
    %v277 = vmul.f32 %v276, 1.442695
    %v278 = vpow.pop %v277
    %v279 = vadd.f32 %v278, 1.0
    %v280 = vrcp.pop %v279
    %v281 = vmul.f32 1.0, %v280
    %v282 = vtanh.pop %v275
    %284 = vrot.lane.b32.xlu0 %v201, 32
    %v285 = vpop.permute.xlu0 %284
    %v287 = vmul.f32 %v281, %v285
    %289 = vrot.lane.b32.xlu0 %v282, 64
    %v290 = vpop.permute.xlu0 %289
    %v292 = vmul.f32 %v281, %v290
    %294 = vrot.lane.b32.xlu0 %v292, 32
    %v295 = vpop.permute.xlu0 %294
    %v297 = vadd.f32 %v287, %v295
    %v298 = vtanh.pop %v297
    %300 = vrot.lane.b32.xlu0 %v298, 64
    %v301 = vpop.permute.xlu0 %300
    %v303 = vmul.f32 %v281, %v301
    %305 = vrot.lane.b32.xlu0 %v303, 32
    %v306 = vpop.permute.xlu0 %305
    %vm308 = vcmask 257024
    %309 = vst.msk [vmem:[#allocation2] sm:$0xf] %vm308, %v306
    %v310 = vsel %vm102, %v306, 0
    %312 = vmatprep.subr.mxu0 0.0
    %313 = vmatpush1.msra.mxu0 0.0
    %314 = vmatprep.subr.mxu0 0.0
    %315 = vmatpush1.msra.mxu0 0.0
    %316 = vmatprep.subr.mxu0 0.0
    %317 = vmatpush1.msra.mxu0 0.0
    %318 = vmatprep.subr.mxu0 0.0
    %319 = vmatpush1.msra.mxu0 0.0
    %320 = vmatprep.subr.mxu0 0.0
    %321 = vmatpush1.msra.mxu0 0.0
    %322 = vmatprep.subr.mxu0 0.0
    %323 = vmatpush1.msra.mxu0 0.0
    %324 = vmatprep.subr.mxu0 0.0
    %325 = vmatpush1.msra.mxu0 0.0
    %326 = vmatprep.subr.mxu0 0.0
    %327 = vmatpush1.msra.mxu0 0.0
    %328 = vmatprep.subr.mxu0 0.0
    %329 = vmatpush1.msra.mxu0 0.0
    %330 = vmatprep.subr.mxu0 0.0
    %331 = vmatpush1.msra.mxu0 0.0
    %332 = vmatprep.subr.mxu0 0.0
    %333 = vmatpush1.msra.mxu0 0.0
    %334 = vmatprep.subr.mxu0 0.0
    %335 = vmatpush1.msra.mxu0 0.0
    %336 = vmatprep.subr.mxu0 0.0
    %337 = vmatpush1.msra.mxu0 %v90
    %338 = vmatprep.subr.mxu0 0.0
    %339 = vmatpush1.msra.mxu0 %v89
    %340 = vmatprep.subr.mxu0 0.0
    %341 = vmatpush1.msra.mxu0 %v88
    %342 = vmatprep.subr.mxu0 0.0
    %343 = vmatpush1.msra.mxu0 %v87
    %344 = vmatprep.subr.mxu0 0.0
    %345 = vmatpush2.msra.mxu0 0.0
    %346 = vmatprep.subr.mxu0 0.0
    %347 = vmatpush2.msra.mxu0 0.0
    %348 = vmatprep.subr.mxu0 0.0
    %349 = vmatpush2.msra.mxu0 0.0
    %350 = vmatprep.subr.mxu0 0.0
    %351 = vmatpush2.msra.mxu0 0.0
    %352 = vmatprep.subr.mxu0 0.0
    %353 = vmatpush2.msra.mxu0 0.0
    %354 = vmatprep.subr.mxu0 0.0
    %355 = vmatpush2.msra.mxu0 0.0
    %356 = vmatprep.subr.mxu0 0.0
    %357 = vmatpush2.msra.mxu0 0.0
    %358 = vmatprep.subr.mxu0 0.0
    %359 = vmatpush2.msra.mxu0 0.0
    %360 = vmatprep.subr.mxu0 0.0
    %361 = vmatpush2.msra.mxu0 0.0
    %362 = vmatprep.subr.mxu0 0.0
    %363 = vmatpush2.msra.mxu0 0.0
    %364 = vmatprep.subr.mxu0 0.0
    %365 = vmatpush2.msra.mxu0 0.0
    %366 = vmatprep.subr.mxu0 0.0
    %367 = vmatpush2.msra.mxu0 0.0
    %368 = vmatprep.subr.mxu0 0.0
    %369 = vmatpush2.msra.mxu0 0.0
    %370 = vmatprep.subr.mxu0 0.0
    %371 = vmatpush2.msra.mxu0 0.0
    %372 = vmatprep.subr.mxu0 0.0
    %373 = vmatpush2.msra.mxu0 0.0
    %374 = vmatprep.subr.mxu0 0.0
    %375 = vmatpush2.msra.mxu0 0.0
    %376 = vmatprep.mubr.f32.mxu0 0.0
    %377 = vmatmul.mubr.f32.gmra.mxu0 %v310
    %v378 = vpop.f32.mrf.mxu0
    %v379 = vadd.f32 0.0, %v378
    %v380 = vpop.f32.mrf.mxu0
    %381 = vdwg.mxu0
    %v383 = vrot.slane %v379, 4
    %v385 = vadd.f32 %v182, %v383
    %v386 = vxor.u32 %v385, 2147483648
    %v387 = vmul.f32 %v386, 1.442695
    %v388 = vpow.pop %v387
    %v389 = vadd.f32 %v388, 1.0
    %v390 = vrcp.pop %v389
    %v391 = vmul.f32 1.0, %v390
    %v392 = vtanh.pop %v385
    %v394 = vrot.slane %v297, 4
    %v396 = vmul.f32 %v391, %v394
    %398 = vrot.lane.b32.xlu0 %v392, 64
    %v399 = vpop.permute.xlu0 %398
    %v401 = vmul.f32 %v391, %v399
    %403 = vrot.lane.b32.xlu0 %v401, 32
    %v404 = vpop.permute.xlu0 %403
    %v406 = vadd.f32 %v396, %v404
    %v407 = vtanh.pop %v406
    %409 = vrot.lane.b32.xlu0 %v407, 64
    %v410 = vpop.permute.xlu0 %409
    %v412 = vmul.f32 %v391, %v410
    %414 = vrot.lane.b32.xlu0 %v412, 32
    %v415 = vpop.permute.xlu0 %414
    %vm417 = vcmask 261124
    %418 = vst.msk [vmem:[#allocation2] sm:$0xf0] %vm417, %v415
    %v419 = vrot.slane %v412, 4
    %420 = vrot.lane.b32.xlu0 %v419, 32
    %v421 = vpop.permute.xlu0 %420
    %v422 = vsel %vm102, %v421, 0
    %424 = vmatprep.subr.mxu0 0.0
    %425 = vmatpush1.msra.mxu0 0.0
    %426 = vmatprep.subr.mxu0 0.0
    %427 = vmatpush1.msra.mxu0 0.0
    %428 = vmatprep.subr.mxu0 0.0
    %429 = vmatpush1.msra.mxu0 0.0
    %430 = vmatprep.subr.mxu0 0.0
    %431 = vmatpush1.msra.mxu0 0.0
    %432 = vmatprep.subr.mxu0 0.0
    %433 = vmatpush1.msra.mxu0 0.0
    %434 = vmatprep.subr.mxu0 0.0
    %435 = vmatpush1.msra.mxu0 0.0
    %436 = vmatprep.subr.mxu0 0.0
    %437 = vmatpush1.msra.mxu0 0.0
    %438 = vmatprep.subr.mxu0 0.0
    %439 = vmatpush1.msra.mxu0 0.0
    %440 = vmatprep.subr.mxu0 0.0
    %441 = vmatpush1.msra.mxu0 0.0
    %442 = vmatprep.subr.mxu0 0.0
    %443 = vmatpush1.msra.mxu0 0.0
    %444 = vmatprep.subr.mxu0 0.0
    %445 = vmatpush1.msra.mxu0 0.0
    %446 = vmatprep.subr.mxu0 0.0
    %447 = vmatpush1.msra.mxu0 0.0
    %448 = vmatprep.subr.mxu0 0.0
    %449 = vmatpush1.msra.mxu0 %v90
    %450 = vmatprep.subr.mxu0 0.0
    %451 = vmatpush1.msra.mxu0 %v89
    %452 = vmatprep.subr.mxu0 0.0
    %453 = vmatpush1.msra.mxu0 %v88
    %454 = vmatprep.subr.mxu0 0.0
    %455 = vmatpush1.msra.mxu0 %v87
    %456 = vmatprep.subr.mxu0 0.0
    %457 = vmatpush2.msra.mxu0 0.0
    %458 = vmatprep.subr.mxu0 0.0
    %459 = vmatpush2.msra.mxu0 0.0
    %460 = vmatprep.subr.mxu0 0.0
    %461 = vmatpush2.msra.mxu0 0.0
    %462 = vmatprep.subr.mxu0 0.0
    %463 = vmatpush2.msra.mxu0 0.0
    %464 = vmatprep.subr.mxu0 0.0
    %465 = vmatpush2.msra.mxu0 0.0
    %466 = vmatprep.subr.mxu0 0.0
    %467 = vmatpush2.msra.mxu0 0.0
    %468 = vmatprep.subr.mxu0 0.0
    %469 = vmatpush2.msra.mxu0 0.0
    %470 = vmatprep.subr.mxu0 0.0
    %471 = vmatpush2.msra.mxu0 0.0
    %472 = vmatprep.subr.mxu0 0.0
    %473 = vmatpush2.msra.mxu0 0.0
    %474 = vmatprep.subr.mxu0 0.0
    %475 = vmatpush2.msra.mxu0 0.0
    %476 = vmatprep.subr.mxu0 0.0
    %477 = vmatpush2.msra.mxu0 0.0
    %478 = vmatprep.subr.mxu0 0.0
    %479 = vmatpush2.msra.mxu0 0.0
    %480 = vmatprep.subr.mxu0 0.0
    %481 = vmatpush2.msra.mxu0 0.0
    %482 = vmatprep.subr.mxu0 0.0
    %483 = vmatpush2.msra.mxu0 0.0
    %484 = vmatprep.subr.mxu0 0.0
    %485 = vmatpush2.msra.mxu0 0.0
    %486 = vmatprep.subr.mxu0 0.0
    %487 = vmatpush2.msra.mxu0 0.0
    %488 = vmatprep.mubr.f32.mxu0 0.0
    %489 = vmatmul.mubr.f32.gmra.mxu0 %v422
    %v490 = vpop.f32.mrf.mxu0
    %v491 = vadd.f32 0.0, %v490
    %v492 = vpop.f32.mrf.mxu0
    %493 = vdwg.mxu0
    %v494 = vadd.f32 %v187, %v491
    %v495 = vxor.u32 %v494, 2147483648
    %v496 = vmul.f32 %v495, 1.442695
    %v497 = vpow.pop %v496
    %v498 = vadd.f32 %v497, 1.0
    %v499 = vrcp.pop %v498
    %v500 = vmul.f32 1.0, %v499
    %v501 = vtanh.pop %v494
    %v503 = vrot.slane %v406, 4
    %v505 = vmul.f32 %v500, %v503
    %507 = vrot.lane.b32.xlu0 %v501, 64
    %v508 = vpop.permute.xlu0 %507
    %v510 = vmul.f32 %v500, %v508
    %512 = vrot.lane.b32.xlu0 %v510, 32
    %v513 = vpop.permute.xlu0 %512
    %v515 = vadd.f32 %v505, %v513
    %v516 = vtanh.pop %v515
    %518 = vrot.lane.b32.xlu0 %v516, 64
    %v519 = vpop.permute.xlu0 %518
    %v521 = vmul.f32 %v500, %v519
    %523 = vrot.lane.b32.xlu0 %v521, 32
    %v524 = vpop.permute.xlu0 %523
    %526 = vst.msk [vmem:[#allocation2 + $0x8] sm:$0xf] %vm308, %v524
    %v527 = vsel %vm102, %v524, 0
    %529 = vmatprep.subr.mxu0 0.0
    %530 = vmatpush1.msra.mxu0 0.0
    %531 = vmatprep.subr.mxu0 0.0
    %532 = vmatpush1.msra.mxu0 0.0
    %533 = vmatprep.subr.mxu0 0.0
    %534 = vmatpush1.msra.mxu0 0.0
    %535 = vmatprep.subr.mxu0 0.0
    %536 = vmatpush1.msra.mxu0 0.0
    %537 = vmatprep.subr.mxu0 0.0
    %538 = vmatpush1.msra.mxu0 0.0
    %539 = vmatprep.subr.mxu0 0.0
    %540 = vmatpush1.msra.mxu0 0.0
    %541 = vmatprep.subr.mxu0 0.0
    %542 = vmatpush1.msra.mxu0 0.0
    %543 = vmatprep.subr.mxu0 0.0
    %544 = vmatpush1.msra.mxu0 0.0
    %545 = vmatprep.subr.mxu0 0.0
    %546 = vmatpush1.msra.mxu0 0.0
    %547 = vmatprep.subr.mxu0 0.0
    %548 = vmatpush1.msra.mxu0 0.0
    %549 = vmatprep.subr.mxu0 0.0
    %550 = vmatpush1.msra.mxu0 0.0
    %551 = vmatprep.subr.mxu0 0.0
    %552 = vmatpush1.msra.mxu0 0.0
    %553 = vmatprep.subr.mxu0 0.0
    %554 = vmatpush1.msra.mxu0 %v90
    %555 = vmatprep.subr.mxu0 0.0
    %556 = vmatpush1.msra.mxu0 %v89
    %557 = vmatprep.subr.mxu0 0.0
    %558 = vmatpush1.msra.mxu0 %v88
    %559 = vmatprep.subr.mxu0 0.0
    %560 = vmatpush1.msra.mxu0 %v87
    %561 = vmatprep.subr.mxu0 0.0
    %562 = vmatpush2.msra.mxu0 0.0
    %563 = vmatprep.subr.mxu0 0.0
    %564 = vmatpush2.msra.mxu0 0.0
    %565 = vmatprep.subr.mxu0 0.0
    %566 = vmatpush2.msra.mxu0 0.0
    %567 = vmatprep.subr.mxu0 0.0
    %568 = vmatpush2.msra.mxu0 0.0
    %569 = vmatprep.subr.mxu0 0.0
    %570 = vmatpush2.msra.mxu0 0.0
    %571 = vmatprep.subr.mxu0 0.0
    %572 = vmatpush2.msra.mxu0 0.0
    %573 = vmatprep.subr.mxu0 0.0
    %574 = vmatpush2.msra.mxu0 0.0
    %575 = vmatprep.subr.mxu0 0.0
    %576 = vmatpush2.msra.mxu0 0.0
    %577 = vmatprep.subr.mxu0 0.0
    %578 = vmatpush2.msra.mxu0 0.0
    %579 = vmatprep.subr.mxu0 0.0
    %580 = vmatpush2.msra.mxu0 0.0
    %581 = vmatprep.subr.mxu0 0.0
    %582 = vmatpush2.msra.mxu0 0.0
    %583 = vmatprep.subr.mxu0 0.0
    %584 = vmatpush2.msra.mxu0 0.0
    %585 = vmatprep.subr.mxu0 0.0
    %586 = vmatpush2.msra.mxu0 0.0
    %587 = vmatprep.subr.mxu0 0.0
    %588 = vmatpush2.msra.mxu0 0.0
    %589 = vmatprep.subr.mxu0 0.0
    %590 = vmatpush2.msra.mxu0 0.0
    %591 = vmatprep.subr.mxu0 0.0
    %592 = vmatpush2.msra.mxu0 0.0
    %593 = vmatprep.mubr.f32.mxu0 0.0
    %594 = vmatmul.mubr.f32.gmra.mxu0 %v527
    %v595 = vpop.f32.mrf.mxu0
    %v596 = vadd.f32 0.0, %v595
    %v597 = vpop.f32.mrf.mxu0
    %598 = vdwg.mxu0
    %v600 = vrot.slane %v596, 4
    %v602 = vadd.f32 %v187, %v600
    %v603 = vxor.u32 %v602, 2147483648
    %v604 = vmul.f32 %v603, 1.442695
    %v605 = vpow.pop %v604
    %v606 = vadd.f32 %v605, 1.0
    %v607 = vrcp.pop %v606
    %v608 = vmul.f32 1.0, %v607
    %v609 = vtanh.pop %v602
    %v611 = vrot.slane %v515, 4
    %v613 = vmul.f32 %v608, %v611
    %615 = vrot.lane.b32.xlu0 %v609, 64
    %v616 = vpop.permute.xlu0 %615
    %v618 = vmul.f32 %v608, %v616
    %620 = vrot.lane.b32.xlu0 %v618, 32
    %v621 = vpop.permute.xlu0 %620
    %v623 = vadd.f32 %v613, %v621
    %v624 = vtanh.pop %v623
    %626 = vrot.lane.b32.xlu0 %v624, 64
    %v627 = vpop.permute.xlu0 %626
    %v629 = vmul.f32 %v608, %v627
    %631 = vrot.lane.b32.xlu0 %v629, 32
    %v632 = vpop.permute.xlu0 %631
    %634 = vst.msk [vmem:[#allocation2 + $0x8] sm:$0xf0] %vm417, %v632
    %v635 = vrot.slane %v629, 4
    %636 = vrot.lane.b32.xlu0 %v635, 32
    %v637 = vpop.permute.xlu0 %636
    %v638 = vsel %vm102, %v637, 0
    %640 = vmatprep.subr.mxu0 0.0
    %641 = vmatpush1.msra.mxu0 0.0
    %642 = vmatprep.subr.mxu0 0.0
    %643 = vmatpush1.msra.mxu0 0.0
    %644 = vmatprep.subr.mxu0 0.0
    %645 = vmatpush1.msra.mxu0 0.0
    %646 = vmatprep.subr.mxu0 0.0
    %647 = vmatpush1.msra.mxu0 0.0
    %648 = vmatprep.subr.mxu0 0.0
    %649 = vmatpush1.msra.mxu0 0.0
    %650 = vmatprep.subr.mxu0 0.0
    %651 = vmatpush1.msra.mxu0 0.0
    %652 = vmatprep.subr.mxu0 0.0
    %653 = vmatpush1.msra.mxu0 0.0
    %654 = vmatprep.subr.mxu0 0.0
    %655 = vmatpush1.msra.mxu0 0.0
    %656 = vmatprep.subr.mxu0 0.0
    %657 = vmatpush1.msra.mxu0 0.0
    %658 = vmatprep.subr.mxu0 0.0
    %659 = vmatpush1.msra.mxu0 0.0
    %660 = vmatprep.subr.mxu0 0.0
    %661 = vmatpush1.msra.mxu0 0.0
    %662 = vmatprep.subr.mxu0 0.0
    %663 = vmatpush1.msra.mxu0 0.0
    %664 = vmatprep.subr.mxu0 0.0
    %665 = vmatpush1.msra.mxu0 %v90
    %666 = vmatprep.subr.mxu0 0.0
    %667 = vmatpush1.msra.mxu0 %v89
    %668 = vmatprep.subr.mxu0 0.0
    %669 = vmatpush1.msra.mxu0 %v88
    %670 = vmatprep.subr.mxu0 0.0
    %671 = vmatpush1.msra.mxu0 %v87
    %672 = vmatprep.subr.mxu0 0.0
    %673 = vmatpush2.msra.mxu0 0.0
    %674 = vmatprep.subr.mxu0 0.0
    %675 = vmatpush2.msra.mxu0 0.0
    %676 = vmatprep.subr.mxu0 0.0
    %677 = vmatpush2.msra.mxu0 0.0
    %678 = vmatprep.subr.mxu0 0.0
    %679 = vmatpush2.msra.mxu0 0.0
    %680 = vmatprep.subr.mxu0 0.0
    %681 = vmatpush2.msra.mxu0 0.0
    %682 = vmatprep.subr.mxu0 0.0
    %683 = vmatpush2.msra.mxu0 0.0
    %684 = vmatprep.subr.mxu0 0.0
    %685 = vmatpush2.msra.mxu0 0.0
    %686 = vmatprep.subr.mxu0 0.0
    %687 = vmatpush2.msra.mxu0 0.0
    %688 = vmatprep.subr.mxu0 0.0
    %689 = vmatpush2.msra.mxu0 0.0
    %690 = vmatprep.subr.mxu0 0.0
    %691 = vmatpush2.msra.mxu0 0.0
    %692 = vmatprep.subr.mxu0 0.0
    %693 = vmatpush2.msra.mxu0 0.0
    %694 = vmatprep.subr.mxu0 0.0
    %695 = vmatpush2.msra.mxu0 0.0
    %696 = vmatprep.subr.mxu0 0.0
    %697 = vmatpush2.msra.mxu0 0.0
    %698 = vmatprep.subr.mxu0 0.0
    %699 = vmatpush2.msra.mxu0 0.0
    %700 = vmatprep.subr.mxu0 0.0
    %701 = vmatpush2.msra.mxu0 0.0
    %702 = vmatprep.subr.mxu0 0.0
    %703 = vmatpush2.msra.mxu0 0.0
    %704 = vmatprep.mubr.f32.mxu0 0.0
    %705 = vmatmul.mubr.f32.gmra.mxu0 %v638
    %v706 = vpop.f32.mrf.mxu0
    %v707 = vadd.f32 0.0, %v706
    %v708 = vpop.f32.mrf.mxu0
    %709 = vdwg.mxu0
    %v710 = vadd.f32 %v192, %v707
    %v711 = vxor.u32 %v710, 2147483648
    %v712 = vmul.f32 %v711, 1.442695
    %v713 = vpow.pop %v712
    %v714 = vadd.f32 %v713, 1.0
    %v715 = vrcp.pop %v714
    %v716 = vmul.f32 1.0, %v715
    %v717 = vtanh.pop %v710
    %v719 = vrot.slane %v623, 4
    %v721 = vmul.f32 %v716, %v719
    %723 = vrot.lane.b32.xlu0 %v717, 64
    %v724 = vpop.permute.xlu0 %723
    %v726 = vmul.f32 %v716, %v724
    %728 = vrot.lane.b32.xlu0 %v726, 32
    %v729 = vpop.permute.xlu0 %728
    %v731 = vadd.f32 %v721, %v729
    %v732 = vtanh.pop %v731
    %734 = vrot.lane.b32.xlu0 %v732, 64
    %v735 = vpop.permute.xlu0 %734
    %v737 = vmul.f32 %v716, %v735
    %739 = vrot.lane.b32.xlu0 %v737, 32
    %v740 = vpop.permute.xlu0 %739
    %742 = vst.msk [vmem:[#allocation2 + $0x10] sm:$0xf] %vm308, %v740
    %v743 = vsel %vm102, %v740, 0
    %745 = vmatprep.subr.mxu0 0.0
    %746 = vmatpush1.msra.mxu0 0.0
    %747 = vmatprep.subr.mxu0 0.0
    %748 = vmatpush1.msra.mxu0 0.0
    %749 = vmatprep.subr.mxu0 0.0
    %750 = vmatpush1.msra.mxu0 0.0
    %751 = vmatprep.subr.mxu0 0.0
    %752 = vmatpush1.msra.mxu0 0.0
    %753 = vmatprep.subr.mxu0 0.0
    %754 = vmatpush1.msra.mxu0 0.0
    %755 = vmatprep.subr.mxu0 0.0
    %756 = vmatpush1.msra.mxu0 0.0
    %757 = vmatprep.subr.mxu0 0.0
    %758 = vmatpush1.msra.mxu0 0.0
    %759 = vmatprep.subr.mxu0 0.0
    %760 = vmatpush1.msra.mxu0 0.0
    %761 = vmatprep.subr.mxu0 0.0
    %762 = vmatpush1.msra.mxu0 0.0
    %763 = vmatprep.subr.mxu0 0.0
    %764 = vmatpush1.msra.mxu0 0.0
    %765 = vmatprep.subr.mxu0 0.0
    %766 = vmatpush1.msra.mxu0 0.0
    %767 = vmatprep.subr.mxu0 0.0
    %768 = vmatpush1.msra.mxu0 0.0
    %769 = vmatprep.subr.mxu0 0.0
    %770 = vmatpush1.msra.mxu0 %v90
    %771 = vmatprep.subr.mxu0 0.0
    %772 = vmatpush1.msra.mxu0 %v89
    %773 = vmatprep.subr.mxu0 0.0
    %774 = vmatpush1.msra.mxu0 %v88
    %775 = vmatprep.subr.mxu0 0.0
    %776 = vmatpush1.msra.mxu0 %v87
    %777 = vmatprep.subr.mxu0 0.0
    %778 = vmatpush2.msra.mxu0 0.0
    %779 = vmatprep.subr.mxu0 0.0
    %780 = vmatpush2.msra.mxu0 0.0
    %781 = vmatprep.subr.mxu0 0.0
    %782 = vmatpush2.msra.mxu0 0.0
    %783 = vmatprep.subr.mxu0 0.0
    %784 = vmatpush2.msra.mxu0 0.0
    %785 = vmatprep.subr.mxu0 0.0
    %786 = vmatpush2.msra.mxu0 0.0
    %787 = vmatprep.subr.mxu0 0.0
    %788 = vmatpush2.msra.mxu0 0.0
    %789 = vmatprep.subr.mxu0 0.0
    %790 = vmatpush2.msra.mxu0 0.0
    %791 = vmatprep.subr.mxu0 0.0
    %792 = vmatpush2.msra.mxu0 0.0
    %793 = vmatprep.subr.mxu0 0.0
    %794 = vmatpush2.msra.mxu0 0.0
    %795 = vmatprep.subr.mxu0 0.0
    %796 = vmatpush2.msra.mxu0 0.0
    %797 = vmatprep.subr.mxu0 0.0
    %798 = vmatpush2.msra.mxu0 0.0
    %799 = vmatprep.subr.mxu0 0.0
    %800 = vmatpush2.msra.mxu0 0.0
    %801 = vmatprep.subr.mxu0 0.0
    %802 = vmatpush2.msra.mxu0 0.0
    %803 = vmatprep.subr.mxu0 0.0
    %804 = vmatpush2.msra.mxu0 0.0
    %805 = vmatprep.subr.mxu0 0.0
    %806 = vmatpush2.msra.mxu0 0.0
    %807 = vmatprep.subr.mxu0 0.0
    %808 = vmatpush2.msra.mxu0 0.0
    %809 = vmatprep.mubr.f32.mxu0 0.0
    %810 = vmatmul.mubr.f32.gmra.mxu0 %v743
    %v811 = vpop.f32.mrf.mxu0
    %v812 = vadd.f32 0.0, %v811
    %v813 = vpop.f32.mrf.mxu0
    %814 = vdwg.mxu0
    %v816 = vrot.slane %v812, 4
    %v818 = vadd.f32 %v192, %v816
    %v819 = vxor.u32 %v818, 2147483648
    %v820 = vmul.f32 %v819, 1.442695
    %v821 = vpow.pop %v820
    %v822 = vadd.f32 %v821, 1.0
    %v823 = vrcp.pop %v822
    %v824 = vmul.f32 1.0, %v823
    %v825 = vtanh.pop %v818
    %v827 = vrot.slane %v731, 4
    %v829 = vmul.f32 %v824, %v827
    %831 = vrot.lane.b32.xlu0 %v825, 64
    %v832 = vpop.permute.xlu0 %831
    %v834 = vmul.f32 %v824, %v832
    %836 = vrot.lane.b32.xlu0 %v834, 32
    %v837 = vpop.permute.xlu0 %836
    %v839 = vadd.f32 %v829, %v837
    %v840 = vtanh.pop %v839
    %842 = vrot.lane.b32.xlu0 %v840, 64
    %v843 = vpop.permute.xlu0 %842
    %v845 = vmul.f32 %v824, %v843
    %847 = vrot.lane.b32.xlu0 %v845, 32
    %v848 = vpop.permute.xlu0 %847
    %850 = vst.msk [vmem:[#allocation2 + $0x10] sm:$0xf0] %vm417, %v848
    %v851 = vrot.slane %v845, 4
    %852 = vrot.lane.b32.xlu0 %v851, 32
    %v853 = vpop.permute.xlu0 %852
    %v854 = vsel %vm102, %v853, 0
    %856 = vmatprep.subr.mxu0 0.0
    %857 = vmatpush1.msra.mxu0 0.0
    %858 = vmatprep.subr.mxu0 0.0
    %859 = vmatpush1.msra.mxu0 0.0
    %860 = vmatprep.subr.mxu0 0.0
    %861 = vmatpush1.msra.mxu0 0.0
    %862 = vmatprep.subr.mxu0 0.0
    %863 = vmatpush1.msra.mxu0 0.0
    %864 = vmatprep.subr.mxu0 0.0
    %865 = vmatpush1.msra.mxu0 0.0
    %866 = vmatprep.subr.mxu0 0.0
    %867 = vmatpush1.msra.mxu0 0.0
    %868 = vmatprep.subr.mxu0 0.0
    %869 = vmatpush1.msra.mxu0 0.0
    %870 = vmatprep.subr.mxu0 0.0
    %871 = vmatpush1.msra.mxu0 0.0
    %872 = vmatprep.subr.mxu0 0.0
    %873 = vmatpush1.msra.mxu0 0.0
    %874 = vmatprep.subr.mxu0 0.0
    %875 = vmatpush1.msra.mxu0 0.0
    %876 = vmatprep.subr.mxu0 0.0
    %877 = vmatpush1.msra.mxu0 0.0
    %878 = vmatprep.subr.mxu0 0.0
    %879 = vmatpush1.msra.mxu0 0.0
    %880 = vmatprep.subr.mxu0 0.0
    %881 = vmatpush1.msra.mxu0 %v90
    %882 = vmatprep.subr.mxu0 0.0
    %883 = vmatpush1.msra.mxu0 %v89
    %884 = vmatprep.subr.mxu0 0.0
    %885 = vmatpush1.msra.mxu0 %v88
    %886 = vmatprep.subr.mxu0 0.0
    %887 = vmatpush1.msra.mxu0 %v87
    %888 = vmatprep.subr.mxu0 0.0
    %889 = vmatpush2.msra.mxu0 0.0
    %890 = vmatprep.subr.mxu0 0.0
    %891 = vmatpush2.msra.mxu0 0.0
    %892 = vmatprep.subr.mxu0 0.0
    %893 = vmatpush2.msra.mxu0 0.0
    %894 = vmatprep.subr.mxu0 0.0
    %895 = vmatpush2.msra.mxu0 0.0
    %896 = vmatprep.subr.mxu0 0.0
    %897 = vmatpush2.msra.mxu0 0.0
    %898 = vmatprep.subr.mxu0 0.0
    %899 = vmatpush2.msra.mxu0 0.0
    %900 = vmatprep.subr.mxu0 0.0
    %901 = vmatpush2.msra.mxu0 0.0
    %902 = vmatprep.subr.mxu0 0.0
    %903 = vmatpush2.msra.mxu0 0.0
    %904 = vmatprep.subr.mxu0 0.0
    %905 = vmatpush2.msra.mxu0 0.0
    %906 = vmatprep.subr.mxu0 0.0
    %907 = vmatpush2.msra.mxu0 0.0
    %908 = vmatprep.subr.mxu0 0.0
    %909 = vmatpush2.msra.mxu0 0.0
    %910 = vmatprep.subr.mxu0 0.0
    %911 = vmatpush2.msra.mxu0 0.0
    %912 = vmatprep.subr.mxu0 0.0
    %913 = vmatpush2.msra.mxu0 0.0
    %914 = vmatprep.subr.mxu0 0.0
    %915 = vmatpush2.msra.mxu0 0.0
    %916 = vmatprep.subr.mxu0 0.0
    %917 = vmatpush2.msra.mxu0 0.0
    %918 = vmatprep.subr.mxu0 0.0
    %919 = vmatpush2.msra.mxu0 0.0
    %920 = vmatprep.mubr.f32.mxu0 0.0
    %921 = vmatmul.mubr.f32.gmra.mxu0 %v854
    %v922 = vpop.f32.mrf.mxu0
    %v923 = vadd.f32 0.0, %v922
    %v924 = vpop.f32.mrf.mxu0
    %925 = vdwg.mxu0
    %v926 = vadd.f32 %v197, %v923
    %v927 = vxor.u32 %v926, 2147483648
    %v928 = vmul.f32 %v927, 1.442695
    %v929 = vpow.pop %v928
    %v930 = vadd.f32 %v929, 1.0
    %v931 = vrcp.pop %v930
    %v932 = vmul.f32 1.0, %v931
    %v933 = vtanh.pop %v926
    %v935 = vrot.slane %v839, 4
    %v937 = vmul.f32 %v932, %v935
    %939 = vrot.lane.b32.xlu0 %v933, 64
    %v940 = vpop.permute.xlu0 %939
    %v942 = vmul.f32 %v932, %v940
    %944 = vrot.lane.b32.xlu0 %v942, 32
    %v945 = vpop.permute.xlu0 %944
    %v947 = vadd.f32 %v937, %v945
    %v948 = vtanh.pop %v947
    %950 = vrot.lane.b32.xlu0 %v948, 64
    %v951 = vpop.permute.xlu0 %950
    %v953 = vmul.f32 %v932, %v951
    %955 = vrot.lane.b32.xlu0 %v953, 32
    %v956 = vpop.permute.xlu0 %955
    %958 = vst.msk [vmem:[#allocation2 + $0x18] sm:$0xf] %vm308, %v956
    %v959 = vsel %vm102, %v956, 0
    %961 = vmatprep.subr.mxu0 0.0
    %962 = vmatpush1.msra.mxu0 0.0
    %963 = vmatprep.subr.mxu0 0.0
    %964 = vmatpush1.msra.mxu0 0.0
    %965 = vmatprep.subr.mxu0 0.0
    %966 = vmatpush1.msra.mxu0 0.0
    %967 = vmatprep.subr.mxu0 0.0
    %968 = vmatpush1.msra.mxu0 0.0
    %969 = vmatprep.subr.mxu0 0.0
    %970 = vmatpush1.msra.mxu0 0.0
    %971 = vmatprep.subr.mxu0 0.0
    %972 = vmatpush1.msra.mxu0 0.0
    %973 = vmatprep.subr.mxu0 0.0
    %974 = vmatpush1.msra.mxu0 0.0
    %975 = vmatprep.subr.mxu0 0.0
    %976 = vmatpush1.msra.mxu0 0.0
    %977 = vmatprep.subr.mxu0 0.0
    %978 = vmatpush1.msra.mxu0 0.0
    %979 = vmatprep.subr.mxu0 0.0
    %980 = vmatpush1.msra.mxu0 0.0
    %981 = vmatprep.subr.mxu0 0.0
    %982 = vmatpush1.msra.mxu0 0.0
    %983 = vmatprep.subr.mxu0 0.0
    %984 = vmatpush1.msra.mxu0 0.0
    %985 = vmatprep.subr.mxu0 0.0
    %986 = vmatpush1.msra.mxu0 %v90
    %987 = vmatprep.subr.mxu0 0.0
    %988 = vmatpush1.msra.mxu0 %v89
    %989 = vmatprep.subr.mxu0 0.0
    %990 = vmatpush1.msra.mxu0 %v88
    %991 = vmatprep.subr.mxu0 0.0
    %992 = vmatpush1.msra.mxu0 %v87
    %993 = vmatprep.subr.mxu0 0.0
    %994 = vmatpush2.msra.mxu0 0.0
    %995 = vmatprep.subr.mxu0 0.0
    %996 = vmatpush2.msra.mxu0 0.0
    %997 = vmatprep.subr.mxu0 0.0
    %998 = vmatpush2.msra.mxu0 0.0
    %999 = vmatprep.subr.mxu0 0.0
    %1000 = vmatpush2.msra.mxu0 0.0
    %1001 = vmatprep.subr.mxu0 0.0
    %1002 = vmatpush2.msra.mxu0 0.0
    %1003 = vmatprep.subr.mxu0 0.0
    %1004 = vmatpush2.msra.mxu0 0.0
    %1005 = vmatprep.subr.mxu0 0.0
    %1006 = vmatpush2.msra.mxu0 0.0
    %1007 = vmatprep.subr.mxu0 0.0
    %1008 = vmatpush2.msra.mxu0 0.0
    %1009 = vmatprep.subr.mxu0 0.0
    %1010 = vmatpush2.msra.mxu0 0.0
    %1011 = vmatprep.subr.mxu0 0.0
    %1012 = vmatpush2.msra.mxu0 0.0
    %1013 = vmatprep.subr.mxu0 0.0
    %1014 = vmatpush2.msra.mxu0 0.0
    %1015 = vmatprep.subr.mxu0 0.0
    %1016 = vmatpush2.msra.mxu0 0.0
    %1017 = vmatprep.subr.mxu0 0.0
    %1018 = vmatpush2.msra.mxu0 0.0
    %1019 = vmatprep.subr.mxu0 0.0
    %1020 = vmatpush2.msra.mxu0 0.0
    %1021 = vmatprep.subr.mxu0 0.0
    %1022 = vmatpush2.msra.mxu0 0.0
    %1023 = vmatprep.subr.mxu0 0.0
    %1024 = vmatpush2.msra.mxu0 0.0
    %1025 = vmatprep.mubr.f32.mxu0 0.0
    %1026 = vmatmul.mubr.f32.gmra.mxu0 %v959
    %v1027 = vpop.f32.mrf.mxu0
    %v1028 = vadd.f32 0.0, %v1027
    %v1029 = vpop.f32.mrf.mxu0
    %1030 = vdwg.mxu0
    %v1032 = vrot.slane %v1028, 4
    %v1034 = vadd.f32 %v197, %v1032
    %v1035 = vxor.u32 %v1034, 2147483648
    %v1036 = vmul.f32 %v1035, 1.442695
    %v1037 = vpow.pop %v1036
    %v1038 = vadd.f32 %v1037, 1.0
    %v1039 = vrcp.pop %v1038
    %v1040 = vmul.f32 1.0, %v1039
    %v1041 = vtanh.pop %v1034
    %v1043 = vrot.slane %v947, 4
    %v1045 = vmul.f32 %v1040, %v1043
    %1047 = vrot.lane.b32.xlu0 %v1041, 64
    %v1048 = vpop.permute.xlu0 %1047
    %v1050 = vmul.f32 %v1040, %v1048
    %1052 = vrot.lane.b32.xlu0 %v1050, 32
    %v1053 = vpop.permute.xlu0 %1052
    %v1055 = vadd.f32 %v1045, %v1053
    %v1056 = vtanh.pop %v1055
    %1058 = vrot.lane.b32.xlu0 %v1056, 64
    %v1059 = vpop.permute.xlu0 %1058
    %v1061 = vmul.f32 %v1040, %v1059
    %1063 = vrot.lane.b32.xlu0 %v1061, 32
    %v1064 = vpop.permute.xlu0 %1063
    %1066 = vst.msk [vmem:[#allocation2 + $0x18] sm:$0xf0] %vm417, %v1064
    %1067 = vst.msk [vmem:[#allocation12 - $0x4] sm:$0xf0] %vm417, %v1064
    %1069 = vrot.lane.b32.xlu0 %v1055, 96
    %v1070 = vpop.permute.xlu0 %1069
    %1072 = vst.msk [vmem:[#allocation14 - $0x4] sm:$0xf0] %vm417, %v1070
    %v1073 = vld [vmem:[#allocation2] sm:$0xff]
    %v1074 = vld [vmem:[#allocation2 + $0x8] sm:$0xff]
    %v1075 = vld [vmem:[#allocation2 + $0x10] sm:$0xff]
    %v1076 = vld [vmem:[#allocation2 + $0x18] sm:$0xff]
    %v1078 = vsel %vm102, %v1073, 0
    %v1081 = vsel %vm102, %v1074, 0
    %v1084 = vsel %vm102, %v1075, 0
    %v1087 = vsel %vm102, %v1076, 0
    %1089 = vmatprep.subr.mxu0 0.0
    %1090 = vmatpush1.msra.mxu0 0.0
    %1091 = vmatprep.subr.mxu0 0.0
    %1092 = vmatpush1.msra.mxu0 0.0
    %1093 = vmatprep.subr.mxu0 0.0
    %1094 = vmatpush1.msra.mxu0 0.0
    %1095 = vmatprep.subr.mxu0 0.0
    %1096 = vmatpush1.msra.mxu0 0.0
    %1097 = vmatprep.subr.mxu0 0.0
    %1098 = vmatpush1.msra.mxu0 0.0
    %1099 = vmatprep.subr.mxu0 0.0
    %1100 = vmatpush1.msra.mxu0 0.0
    %1101 = vmatprep.subr.mxu0 0.0
    %1102 = vmatpush1.msra.mxu0 0.0
    %1103 = vmatprep.subr.mxu0 0.0
    %1104 = vmatpush1.msra.mxu0 0.0
    %1105 = vmatprep.subr.mxu0 0.0
    %1106 = vmatpush1.msra.mxu0 0.0
    %1107 = vmatprep.subr.mxu0 0.0
    %1108 = vmatpush1.msra.mxu0 0.0
    %1109 = vmatprep.subr.mxu0 0.0
    %1110 = vmatpush1.msra.mxu0 0.0
    %1111 = vmatprep.subr.mxu0 0.0
    %1112 = vmatpush1.msra.mxu0 0.0
    %1113 = vmatprep.subr.mxu0 0.0
    %1114 = vmatpush1.msra.mxu0 %v86
    %1115 = vmatprep.subr.mxu0 0.0
    %1116 = vmatpush1.msra.mxu0 %v85
    %1117 = vmatprep.subr.mxu0 0.0
    %1118 = vmatpush1.msra.mxu0 %v84
    %1119 = vmatprep.subr.mxu0 0.0
    %1120 = vmatpush1.msra.mxu0 %v83
    %1121 = vmatprep.subr.mxu0 0.0
    %1122 = vmatpush2.msra.mxu0 0.0
    %1123 = vmatprep.subr.mxu0 0.0
    %1124 = vmatpush2.msra.mxu0 0.0
    %1125 = vmatprep.subr.mxu0 0.0
    %1126 = vmatpush2.msra.mxu0 0.0
    %1127 = vmatprep.subr.mxu0 0.0
    %1128 = vmatpush2.msra.mxu0 0.0
    %1129 = vmatprep.subr.mxu0 0.0
    %1130 = vmatpush2.msra.mxu0 0.0
    %1131 = vmatprep.subr.mxu0 0.0
    %1132 = vmatpush2.msra.mxu0 0.0
    %1133 = vmatprep.subr.mxu0 0.0
    %1134 = vmatpush2.msra.mxu0 0.0
    %1135 = vmatprep.subr.mxu0 0.0
    %1136 = vmatpush2.msra.mxu0 0.0
    %1137 = vmatprep.subr.mxu0 0.0
    %1138 = vmatpush2.msra.mxu0 0.0
    %1139 = vmatprep.subr.mxu0 0.0
    %1140 = vmatpush2.msra.mxu0 0.0
    %1141 = vmatprep.subr.mxu0 0.0
    %1142 = vmatpush2.msra.mxu0 0.0
    %1143 = vmatprep.subr.mxu0 0.0
    %1144 = vmatpush2.msra.mxu0 0.0
    %1145 = vmatprep.subr.mxu0 0.0
    %1146 = vmatpush2.msra.mxu0 0.0
    %1147 = vmatprep.subr.mxu0 0.0
    %1148 = vmatpush2.msra.mxu0 0.0
    %1149 = vmatprep.subr.mxu0 0.0
    %1150 = vmatpush2.msra.mxu0 0.0
    %1151 = vmatprep.subr.mxu0 0.0
    %1152 = vmatpush2.msra.mxu0 0.0
    %1153 = vmatprep.mubr.f32.mxu0 0.0
    %1154 = vmatmul.mubr.f32.gmra.mxu0 %v1078
    %v1155 = vpop.f32.mrf.mxu0
    %v1156 = vadd.f32 %v100, %v1155
    %v1157 = vpop.f32.mrf.mxu0
    %1158 = vmatprep.mubr.f32.mxu0 0.0
    %1159 = vmatmul.mubr.f32.gmra.mxu0 %v1081
    %v1160 = vpop.f32.mrf.mxu0
    %v1161 = vadd.f32 %v100, %v1160
    %v1162 = vpop.f32.mrf.mxu0
    %1163 = vmatprep.mubr.f32.mxu0 0.0
    %1164 = vmatmul.mubr.f32.gmra.mxu0 %v1084
    %v1165 = vpop.f32.mrf.mxu0
    %v1166 = vadd.f32 %v100, %v1165
    %v1167 = vpop.f32.mrf.mxu0
    %1168 = vmatprep.mubr.f32.mxu0 0.0
    %1169 = vmatmul.mubr.f32.gmra.mxu0 %v1087
    %v1170 = vpop.f32.mrf.mxu0
    %v1171 = vadd.f32 %v100, %v1170
    %v1172 = vpop.f32.mrf.mxu0
    %1173 = vdwg.mxu0
    %s1174 = scalar_lea.vmem [#allocation6], 4
    %v1175 = vld [vmem:[%s1174] sm:$0xf]
    %s1176 = scalar_lea.vmem %s2, 4
    %v1177 = vld [vmem:[%s1176] sm:$0xf]
    %v1179 = vsel %vm102, %v1175, 0
    %1181 = vmatprep.subr.mxu0 0.0
    %1182 = vmatpush1.msra.mxu0 0.0
    %1183 = vmatprep.subr.mxu0 0.0
    %1184 = vmatpush1.msra.mxu0 0.0
    %1185 = vmatprep.subr.mxu0 0.0
    %1186 = vmatpush1.msra.mxu0 0.0
    %1187 = vmatprep.subr.mxu0 0.0
    %1188 = vmatpush1.msra.mxu0 0.0
    %1189 = vmatprep.subr.mxu0 0.0
    %1190 = vmatpush1.msra.mxu0 0.0
    %1191 = vmatprep.subr.mxu0 0.0
    %1192 = vmatpush1.msra.mxu0 0.0
    %1193 = vmatprep.subr.mxu0 0.0
    %1194 = vmatpush1.msra.mxu0 0.0
    %1195 = vmatprep.subr.mxu0 0.0
    %1196 = vmatpush1.msra.mxu0 0.0
    %1197 = vmatprep.subr.mxu0 0.0
    %1198 = vmatpush1.msra.mxu0 0.0
    %1199 = vmatprep.subr.mxu0 0.0
    %1200 = vmatpush1.msra.mxu0 0.0
    %1201 = vmatprep.subr.mxu0 0.0
    %1202 = vmatpush1.msra.mxu0 0.0
    %1203 = vmatprep.subr.mxu0 0.0
    %1204 = vmatpush1.msra.mxu0 0.0
    %1205 = vmatprep.subr.mxu0 0.0
    %1206 = vmatpush1.msra.mxu0 %v90
    %1207 = vmatprep.subr.mxu0 0.0
    %1208 = vmatpush1.msra.mxu0 %v89
    %1209 = vmatprep.subr.mxu0 0.0
    %1210 = vmatpush1.msra.mxu0 %v88
    %1211 = vmatprep.subr.mxu0 0.0
    %1212 = vmatpush1.msra.mxu0 %v87
    %1213 = vmatprep.subr.mxu0 0.0
    %1214 = vmatpush2.msra.mxu0 0.0
    %1215 = vmatprep.subr.mxu0 0.0
    %1216 = vmatpush2.msra.mxu0 0.0
    %1217 = vmatprep.subr.mxu0 0.0
    %1218 = vmatpush2.msra.mxu0 0.0
    %1219 = vmatprep.subr.mxu0 0.0
    %1220 = vmatpush2.msra.mxu0 0.0
    %1221 = vmatprep.subr.mxu0 0.0
    %1222 = vmatpush2.msra.mxu0 0.0
    %1223 = vmatprep.subr.mxu0 0.0
    %1224 = vmatpush2.msra.mxu0 0.0
    %1225 = vmatprep.subr.mxu0 0.0
    %1226 = vmatpush2.msra.mxu0 0.0
    %1227 = vmatprep.subr.mxu0 0.0
    %1228 = vmatpush2.msra.mxu0 0.0
    %1229 = vmatprep.subr.mxu0 0.0
    %1230 = vmatpush2.msra.mxu0 0.0
    %1231 = vmatprep.subr.mxu0 0.0
    %1232 = vmatpush2.msra.mxu0 0.0
    %1233 = vmatprep.subr.mxu0 0.0
    %1234 = vmatpush2.msra.mxu0 0.0
    %1235 = vmatprep.subr.mxu0 0.0
    %1236 = vmatpush2.msra.mxu0 0.0
    %1237 = vmatprep.subr.mxu0 0.0
    %1238 = vmatpush2.msra.mxu0 0.0
    %1239 = vmatprep.subr.mxu0 0.0
    %1240 = vmatpush2.msra.mxu0 0.0
    %1241 = vmatprep.subr.mxu0 0.0
    %1242 = vmatpush2.msra.mxu0 0.0
    %1243 = vmatprep.subr.mxu0 0.0
    %1244 = vmatpush2.msra.mxu0 0.0
    %1245 = vmatprep.mubr.f32.mxu0 0.0
    %1246 = vmatmul.mubr.f32.gmra.mxu0 %v1179
    %v1247 = vpop.f32.mrf.mxu0
    %v1248 = vadd.f32 0.0, %v1247
    %v1249 = vpop.f32.mrf.mxu0
    %1250 = vdwg.mxu0
    %v1251 = vadd.f32 %v1156, %v1248
    %v1252 = vxor.u32 %v1251, 2147483648
    %v1253 = vmul.f32 %v1252, 1.442695
    %v1254 = vpow.pop %v1253
    %v1255 = vadd.f32 %v1254, 1.0
    %v1256 = vrcp.pop %v1255
    %v1257 = vmul.f32 1.0, %v1256
    %v1258 = vtanh.pop %v1251
    %1260 = vrot.lane.b32.xlu0 %v1177, 32
    %v1261 = vpop.permute.xlu0 %1260
    %v1263 = vmul.f32 %v1257, %v1261
    %1265 = vrot.lane.b32.xlu0 %v1258, 64
    %v1266 = vpop.permute.xlu0 %1265
    %v1268 = vmul.f32 %v1257, %v1266
    %1270 = vrot.lane.b32.xlu0 %v1268, 32
    %v1271 = vpop.permute.xlu0 %1270
    %v1273 = vadd.f32 %v1263, %v1271
    %v1274 = vtanh.pop %v1273
    %1276 = vrot.lane.b32.xlu0 %v1274, 64
    %v1277 = vpop.permute.xlu0 %1276
    %v1279 = vmul.f32 %v1257, %v1277
    %1281 = vrot.lane.b32.xlu0 %v1279, 32
    %v1282 = vpop.permute.xlu0 %1281
    %1284 = vst.msk [vmem:[#allocation11] sm:$0xf] %vm308, %v1282
    %v1285 = vsel %vm102, %v1282, 0
    %1287 = vmatprep.subr.mxu0 0.0
    %1288 = vmatpush1.msra.mxu0 0.0
    %1289 = vmatprep.subr.mxu0 0.0
    %1290 = vmatpush1.msra.mxu0 0.0
    %1291 = vmatprep.subr.mxu0 0.0
    %1292 = vmatpush1.msra.mxu0 0.0
    %1293 = vmatprep.subr.mxu0 0.0
    %1294 = vmatpush1.msra.mxu0 0.0
    %1295 = vmatprep.subr.mxu0 0.0
    %1296 = vmatpush1.msra.mxu0 0.0
    %1297 = vmatprep.subr.mxu0 0.0
    %1298 = vmatpush1.msra.mxu0 0.0
    %1299 = vmatprep.subr.mxu0 0.0
    %1300 = vmatpush1.msra.mxu0 0.0
    %1301 = vmatprep.subr.mxu0 0.0
    %1302 = vmatpush1.msra.mxu0 0.0
    %1303 = vmatprep.subr.mxu0 0.0
    %1304 = vmatpush1.msra.mxu0 0.0
    %1305 = vmatprep.subr.mxu0 0.0
    %1306 = vmatpush1.msra.mxu0 0.0
    %1307 = vmatprep.subr.mxu0 0.0
    %1308 = vmatpush1.msra.mxu0 0.0
    %1309 = vmatprep.subr.mxu0 0.0
    %1310 = vmatpush1.msra.mxu0 0.0
    %1311 = vmatprep.subr.mxu0 0.0
    %1312 = vmatpush1.msra.mxu0 %v90
    %1313 = vmatprep.subr.mxu0 0.0
    %1314 = vmatpush1.msra.mxu0 %v89
    %1315 = vmatprep.subr.mxu0 0.0
    %1316 = vmatpush1.msra.mxu0 %v88
    %1317 = vmatprep.subr.mxu0 0.0
    %1318 = vmatpush1.msra.mxu0 %v87
    %1319 = vmatprep.subr.mxu0 0.0
    %1320 = vmatpush2.msra.mxu0 0.0
    %1321 = vmatprep.subr.mxu0 0.0
    %1322 = vmatpush2.msra.mxu0 0.0
    %1323 = vmatprep.subr.mxu0 0.0
    %1324 = vmatpush2.msra.mxu0 0.0
    %1325 = vmatprep.subr.mxu0 0.0
    %1326 = vmatpush2.msra.mxu0 0.0
    %1327 = vmatprep.subr.mxu0 0.0
    %1328 = vmatpush2.msra.mxu0 0.0
    %1329 = vmatprep.subr.mxu0 0.0
    %1330 = vmatpush2.msra.mxu0 0.0
    %1331 = vmatprep.subr.mxu0 0.0
    %1332 = vmatpush2.msra.mxu0 0.0
    %1333 = vmatprep.subr.mxu0 0.0
    %1334 = vmatpush2.msra.mxu0 0.0
    %1335 = vmatprep.subr.mxu0 0.0
    %1336 = vmatpush2.msra.mxu0 0.0
    %1337 = vmatprep.subr.mxu0 0.0
    %1338 = vmatpush2.msra.mxu0 0.0
    %1339 = vmatprep.subr.mxu0 0.0
    %1340 = vmatpush2.msra.mxu0 0.0
    %1341 = vmatprep.subr.mxu0 0.0
    %1342 = vmatpush2.msra.mxu0 0.0
    %1343 = vmatprep.subr.mxu0 0.0
    %1344 = vmatpush2.msra.mxu0 0.0
    %1345 = vmatprep.subr.mxu0 0.0
    %1346 = vmatpush2.msra.mxu0 0.0
    %1347 = vmatprep.subr.mxu0 0.0
    %1348 = vmatpush2.msra.mxu0 0.0
    %1349 = vmatprep.subr.mxu0 0.0
    %1350 = vmatpush2.msra.mxu0 0.0
    %1351 = vmatprep.mubr.f32.mxu0 0.0
    %1352 = vmatmul.mubr.f32.gmra.mxu0 %v1285
    %v1353 = vpop.f32.mrf.mxu0
    %v1354 = vadd.f32 0.0, %v1353
    %v1355 = vpop.f32.mrf.mxu0
    %1356 = vdwg.mxu0
    %v1358 = vrot.slane %v1354, 4
    %v1360 = vadd.f32 %v1156, %v1358
    %v1361 = vxor.u32 %v1360, 2147483648
    %v1362 = vmul.f32 %v1361, 1.442695
    %v1363 = vpow.pop %v1362
    %v1364 = vadd.f32 %v1363, 1.0
    %v1365 = vrcp.pop %v1364
    %v1366 = vmul.f32 1.0, %v1365
    %v1367 = vtanh.pop %v1360
    %v1369 = vrot.slane %v1273, 4
    %v1371 = vmul.f32 %v1366, %v1369
    %1373 = vrot.lane.b32.xlu0 %v1367, 64
    %v1374 = vpop.permute.xlu0 %1373
    %v1376 = vmul.f32 %v1366, %v1374
    %1378 = vrot.lane.b32.xlu0 %v1376, 32
    %v1379 = vpop.permute.xlu0 %1378
    %v1381 = vadd.f32 %v1371, %v1379
    %v1382 = vtanh.pop %v1381
    %1384 = vrot.lane.b32.xlu0 %v1382, 64
    %v1385 = vpop.permute.xlu0 %1384
    %v1387 = vmul.f32 %v1366, %v1385
    %1389 = vrot.lane.b32.xlu0 %v1387, 32
    %v1390 = vpop.permute.xlu0 %1389
    %1392 = vst.msk [vmem:[#allocation11] sm:$0xf0] %vm417, %v1390
    %v1393 = vrot.slane %v1387, 4
    %1394 = vrot.lane.b32.xlu0 %v1393, 32
    %v1395 = vpop.permute.xlu0 %1394
    %v1396 = vsel %vm102, %v1395, 0
    %1398 = vmatprep.subr.mxu0 0.0
    %1399 = vmatpush1.msra.mxu0 0.0
    %1400 = vmatprep.subr.mxu0 0.0
    %1401 = vmatpush1.msra.mxu0 0.0
    %1402 = vmatprep.subr.mxu0 0.0
    %1403 = vmatpush1.msra.mxu0 0.0
    %1404 = vmatprep.subr.mxu0 0.0
    %1405 = vmatpush1.msra.mxu0 0.0
    %1406 = vmatprep.subr.mxu0 0.0
    %1407 = vmatpush1.msra.mxu0 0.0
    %1408 = vmatprep.subr.mxu0 0.0
    %1409 = vmatpush1.msra.mxu0 0.0
    %1410 = vmatprep.subr.mxu0 0.0
    %1411 = vmatpush1.msra.mxu0 0.0
    %1412 = vmatprep.subr.mxu0 0.0
    %1413 = vmatpush1.msra.mxu0 0.0
    %1414 = vmatprep.subr.mxu0 0.0
    %1415 = vmatpush1.msra.mxu0 0.0
    %1416 = vmatprep.subr.mxu0 0.0
    %1417 = vmatpush1.msra.mxu0 0.0
    %1418 = vmatprep.subr.mxu0 0.0
    %1419 = vmatpush1.msra.mxu0 0.0
    %1420 = vmatprep.subr.mxu0 0.0
    %1421 = vmatpush1.msra.mxu0 0.0
    %1422 = vmatprep.subr.mxu0 0.0
    %1423 = vmatpush1.msra.mxu0 %v90
    %1424 = vmatprep.subr.mxu0 0.0
    %1425 = vmatpush1.msra.mxu0 %v89
    %1426 = vmatprep.subr.mxu0 0.0
    %1427 = vmatpush1.msra.mxu0 %v88
    %1428 = vmatprep.subr.mxu0 0.0
    %1429 = vmatpush1.msra.mxu0 %v87
    %1430 = vmatprep.subr.mxu0 0.0
    %1431 = vmatpush2.msra.mxu0 0.0
    %1432 = vmatprep.subr.mxu0 0.0
    %1433 = vmatpush2.msra.mxu0 0.0
    %1434 = vmatprep.subr.mxu0 0.0
    %1435 = vmatpush2.msra.mxu0 0.0
    %1436 = vmatprep.subr.mxu0 0.0
    %1437 = vmatpush2.msra.mxu0 0.0
    %1438 = vmatprep.subr.mxu0 0.0
    %1439 = vmatpush2.msra.mxu0 0.0
    %1440 = vmatprep.subr.mxu0 0.0
    %1441 = vmatpush2.msra.mxu0 0.0
    %1442 = vmatprep.subr.mxu0 0.0
    %1443 = vmatpush2.msra.mxu0 0.0
    %1444 = vmatprep.subr.mxu0 0.0
    %1445 = vmatpush2.msra.mxu0 0.0
    %1446 = vmatprep.subr.mxu0 0.0
    %1447 = vmatpush2.msra.mxu0 0.0
    %1448 = vmatprep.subr.mxu0 0.0
    %1449 = vmatpush2.msra.mxu0 0.0
    %1450 = vmatprep.subr.mxu0 0.0
    %1451 = vmatpush2.msra.mxu0 0.0
    %1452 = vmatprep.subr.mxu0 0.0
    %1453 = vmatpush2.msra.mxu0 0.0
    %1454 = vmatprep.subr.mxu0 0.0
    %1455 = vmatpush2.msra.mxu0 0.0
    %1456 = vmatprep.subr.mxu0 0.0
    %1457 = vmatpush2.msra.mxu0 0.0
    %1458 = vmatprep.subr.mxu0 0.0
    %1459 = vmatpush2.msra.mxu0 0.0
    %1460 = vmatprep.subr.mxu0 0.0
    %1461 = vmatpush2.msra.mxu0 0.0
    %1462 = vmatprep.mubr.f32.mxu0 0.0
    %1463 = vmatmul.mubr.f32.gmra.mxu0 %v1396
    %v1464 = vpop.f32.mrf.mxu0
    %v1465 = vadd.f32 0.0, %v1464
    %v1466 = vpop.f32.mrf.mxu0
    %1467 = vdwg.mxu0
    %v1468 = vadd.f32 %v1161, %v1465
    %v1469 = vxor.u32 %v1468, 2147483648
    %v1470 = vmul.f32 %v1469, 1.442695
    %v1471 = vpow.pop %v1470
    %v1472 = vadd.f32 %v1471, 1.0
    %v1473 = vrcp.pop %v1472
    %v1474 = vmul.f32 1.0, %v1473
    %v1475 = vtanh.pop %v1468
    %v1477 = vrot.slane %v1381, 4
    %v1479 = vmul.f32 %v1474, %v1477
    %1481 = vrot.lane.b32.xlu0 %v1475, 64
    %v1482 = vpop.permute.xlu0 %1481
    %v1484 = vmul.f32 %v1474, %v1482
    %1486 = vrot.lane.b32.xlu0 %v1484, 32
    %v1487 = vpop.permute.xlu0 %1486
    %v1489 = vadd.f32 %v1479, %v1487
    %v1490 = vtanh.pop %v1489
    %1492 = vrot.lane.b32.xlu0 %v1490, 64
    %v1493 = vpop.permute.xlu0 %1492
    %v1495 = vmul.f32 %v1474, %v1493
    %1497 = vrot.lane.b32.xlu0 %v1495, 32
    %v1498 = vpop.permute.xlu0 %1497
    %1500 = vst.msk [vmem:[#allocation11 + $0x8] sm:$0xf] %vm308, %v1498
    %v1501 = vsel %vm102, %v1498, 0
    %1503 = vmatprep.subr.mxu0 0.0
    %1504 = vmatpush1.msra.mxu0 0.0
    %1505 = vmatprep.subr.mxu0 0.0
    %1506 = vmatpush1.msra.mxu0 0.0
    %1507 = vmatprep.subr.mxu0 0.0
    %1508 = vmatpush1.msra.mxu0 0.0
    %1509 = vmatprep.subr.mxu0 0.0
    %1510 = vmatpush1.msra.mxu0 0.0
    %1511 = vmatprep.subr.mxu0 0.0
    %1512 = vmatpush1.msra.mxu0 0.0
    %1513 = vmatprep.subr.mxu0 0.0
    %1514 = vmatpush1.msra.mxu0 0.0
    %1515 = vmatprep.subr.mxu0 0.0
    %1516 = vmatpush1.msra.mxu0 0.0
    %1517 = vmatprep.subr.mxu0 0.0
    %1518 = vmatpush1.msra.mxu0 0.0
    %1519 = vmatprep.subr.mxu0 0.0
    %1520 = vmatpush1.msra.mxu0 0.0
    %1521 = vmatprep.subr.mxu0 0.0
    %1522 = vmatpush1.msra.mxu0 0.0
    %1523 = vmatprep.subr.mxu0 0.0
    %1524 = vmatpush1.msra.mxu0 0.0
    %1525 = vmatprep.subr.mxu0 0.0
    %1526 = vmatpush1.msra.mxu0 0.0
    %1527 = vmatprep.subr.mxu0 0.0
    %1528 = vmatpush1.msra.mxu0 %v90
    %1529 = vmatprep.subr.mxu0 0.0
    %1530 = vmatpush1.msra.mxu0 %v89
    %1531 = vmatprep.subr.mxu0 0.0
    %1532 = vmatpush1.msra.mxu0 %v88
    %1533 = vmatprep.subr.mxu0 0.0
    %1534 = vmatpush1.msra.mxu0 %v87
    %1535 = vmatprep.subr.mxu0 0.0
    %1536 = vmatpush2.msra.mxu0 0.0
    %1537 = vmatprep.subr.mxu0 0.0
    %1538 = vmatpush2.msra.mxu0 0.0
    %1539 = vmatprep.subr.mxu0 0.0
    %1540 = vmatpush2.msra.mxu0 0.0
    %1541 = vmatprep.subr.mxu0 0.0
    %1542 = vmatpush2.msra.mxu0 0.0
    %1543 = vmatprep.subr.mxu0 0.0
    %1544 = vmatpush2.msra.mxu0 0.0
    %1545 = vmatprep.subr.mxu0 0.0
    %1546 = vmatpush2.msra.mxu0 0.0
    %1547 = vmatprep.subr.mxu0 0.0
    %1548 = vmatpush2.msra.mxu0 0.0
    %1549 = vmatprep.subr.mxu0 0.0
    %1550 = vmatpush2.msra.mxu0 0.0
    %1551 = vmatprep.subr.mxu0 0.0
    %1552 = vmatpush2.msra.mxu0 0.0
    %1553 = vmatprep.subr.mxu0 0.0
    %1554 = vmatpush2.msra.mxu0 0.0
    %1555 = vmatprep.subr.mxu0 0.0
    %1556 = vmatpush2.msra.mxu0 0.0
    %1557 = vmatprep.subr.mxu0 0.0
    %1558 = vmatpush2.msra.mxu0 0.0
    %1559 = vmatprep.subr.mxu0 0.0
    %1560 = vmatpush2.msra.mxu0 0.0
    %1561 = vmatprep.subr.mxu0 0.0
    %1562 = vmatpush2.msra.mxu0 0.0
    %1563 = vmatprep.subr.mxu0 0.0
    %1564 = vmatpush2.msra.mxu0 0.0
    %1565 = vmatprep.subr.mxu0 0.0
    %1566 = vmatpush2.msra.mxu0 0.0
    %1567 = vmatprep.mubr.f32.mxu0 0.0
    %1568 = vmatmul.mubr.f32.gmra.mxu0 %v1501
    %v1569 = vpop.f32.mrf.mxu0
    %v1570 = vadd.f32 0.0, %v1569
    %v1571 = vpop.f32.mrf.mxu0
    %1572 = vdwg.mxu0
    %v1574 = vrot.slane %v1570, 4
    %v1576 = vadd.f32 %v1161, %v1574
    %v1577 = vxor.u32 %v1576, 2147483648
    %v1578 = vmul.f32 %v1577, 1.442695
    %v1579 = vpow.pop %v1578
    %v1580 = vadd.f32 %v1579, 1.0
    %v1581 = vrcp.pop %v1580
    %v1582 = vmul.f32 1.0, %v1581
    %v1583 = vtanh.pop %v1576
    %v1585 = vrot.slane %v1489, 4
    %v1587 = vmul.f32 %v1582, %v1585
    %1589 = vrot.lane.b32.xlu0 %v1583, 64
    %v1590 = vpop.permute.xlu0 %1589
    %v1592 = vmul.f32 %v1582, %v1590
    %1594 = vrot.lane.b32.xlu0 %v1592, 32
    %v1595 = vpop.permute.xlu0 %1594
    %v1597 = vadd.f32 %v1587, %v1595
    %v1598 = vtanh.pop %v1597
    %1600 = vrot.lane.b32.xlu0 %v1598, 64
    %v1601 = vpop.permute.xlu0 %1600
    %v1603 = vmul.f32 %v1582, %v1601
    %1605 = vrot.lane.b32.xlu0 %v1603, 32
    %v1606 = vpop.permute.xlu0 %1605
    %1608 = vst.msk [vmem:[#allocation11 + $0x8] sm:$0xf0] %vm417, %v1606
    %v1609 = vrot.slane %v1603, 4
    %1610 = vrot.lane.b32.xlu0 %v1609, 32
    %v1611 = vpop.permute.xlu0 %1610
    %v1612 = vsel %vm102, %v1611, 0
    %1614 = vmatprep.subr.mxu0 0.0
    %1615 = vmatpush1.msra.mxu0 0.0
    %1616 = vmatprep.subr.mxu0 0.0
    %1617 = vmatpush1.msra.mxu0 0.0
    %1618 = vmatprep.subr.mxu0 0.0
    %1619 = vmatpush1.msra.mxu0 0.0
    %1620 = vmatprep.subr.mxu0 0.0
    %1621 = vmatpush1.msra.mxu0 0.0
    %1622 = vmatprep.subr.mxu0 0.0
    %1623 = vmatpush1.msra.mxu0 0.0
    %1624 = vmatprep.subr.mxu0 0.0
    %1625 = vmatpush1.msra.mxu0 0.0
    %1626 = vmatprep.subr.mxu0 0.0
    %1627 = vmatpush1.msra.mxu0 0.0
    %1628 = vmatprep.subr.mxu0 0.0
    %1629 = vmatpush1.msra.mxu0 0.0
    %1630 = vmatprep.subr.mxu0 0.0
    %1631 = vmatpush1.msra.mxu0 0.0
    %1632 = vmatprep.subr.mxu0 0.0
    %1633 = vmatpush1.msra.mxu0 0.0
    %1634 = vmatprep.subr.mxu0 0.0
    %1635 = vmatpush1.msra.mxu0 0.0
    %1636 = vmatprep.subr.mxu0 0.0
    %1637 = vmatpush1.msra.mxu0 0.0
    %1638 = vmatprep.subr.mxu0 0.0
    %1639 = vmatpush1.msra.mxu0 %v90
    %1640 = vmatprep.subr.mxu0 0.0
    %1641 = vmatpush1.msra.mxu0 %v89
    %1642 = vmatprep.subr.mxu0 0.0
    %1643 = vmatpush1.msra.mxu0 %v88
    %1644 = vmatprep.subr.mxu0 0.0
    %1645 = vmatpush1.msra.mxu0 %v87
    %1646 = vmatprep.subr.mxu0 0.0
    %1647 = vmatpush2.msra.mxu0 0.0
    %1648 = vmatprep.subr.mxu0 0.0
    %1649 = vmatpush2.msra.mxu0 0.0
    %1650 = vmatprep.subr.mxu0 0.0
    %1651 = vmatpush2.msra.mxu0 0.0
    %1652 = vmatprep.subr.mxu0 0.0
    %1653 = vmatpush2.msra.mxu0 0.0
    %1654 = vmatprep.subr.mxu0 0.0
    %1655 = vmatpush2.msra.mxu0 0.0
    %1656 = vmatprep.subr.mxu0 0.0
    %1657 = vmatpush2.msra.mxu0 0.0
    %1658 = vmatprep.subr.mxu0 0.0
    %1659 = vmatpush2.msra.mxu0 0.0
    %1660 = vmatprep.subr.mxu0 0.0
    %1661 = vmatpush2.msra.mxu0 0.0
    %1662 = vmatprep.subr.mxu0 0.0
    %1663 = vmatpush2.msra.mxu0 0.0
    %1664 = vmatprep.subr.mxu0 0.0
    %1665 = vmatpush2.msra.mxu0 0.0
    %1666 = vmatprep.subr.mxu0 0.0
    %1667 = vmatpush2.msra.mxu0 0.0
    %1668 = vmatprep.subr.mxu0 0.0
    %1669 = vmatpush2.msra.mxu0 0.0
    %1670 = vmatprep.subr.mxu0 0.0
    %1671 = vmatpush2.msra.mxu0 0.0
    %1672 = vmatprep.subr.mxu0 0.0
    %1673 = vmatpush2.msra.mxu0 0.0
    %1674 = vmatprep.subr.mxu0 0.0
    %1675 = vmatpush2.msra.mxu0 0.0
    %1676 = vmatprep.subr.mxu0 0.0
    %1677 = vmatpush2.msra.mxu0 0.0
    %1678 = vmatprep.mubr.f32.mxu0 0.0
    %1679 = vmatmul.mubr.f32.gmra.mxu0 %v1612
    %v1680 = vpop.f32.mrf.mxu0
    %v1681 = vadd.f32 0.0, %v1680
    %v1682 = vpop.f32.mrf.mxu0
    %1683 = vdwg.mxu0
    %v1684 = vadd.f32 %v1166, %v1681
    %v1685 = vxor.u32 %v1684, 2147483648
    %v1686 = vmul.f32 %v1685, 1.442695
    %v1687 = vpow.pop %v1686
    %v1688 = vadd.f32 %v1687, 1.0
    %v1689 = vrcp.pop %v1688
    %v1690 = vmul.f32 1.0, %v1689
    %v1691 = vtanh.pop %v1684
    %v1693 = vrot.slane %v1597, 4
    %v1695 = vmul.f32 %v1690, %v1693
    %1697 = vrot.lane.b32.xlu0 %v1691, 64
    %v1698 = vpop.permute.xlu0 %1697
    %v1700 = vmul.f32 %v1690, %v1698
    %1702 = vrot.lane.b32.xlu0 %v1700, 32
    %v1703 = vpop.permute.xlu0 %1702
    %v1705 = vadd.f32 %v1695, %v1703
    %v1706 = vtanh.pop %v1705
    %1708 = vrot.lane.b32.xlu0 %v1706, 64
    %v1709 = vpop.permute.xlu0 %1708
    %v1711 = vmul.f32 %v1690, %v1709
    %1713 = vrot.lane.b32.xlu0 %v1711, 32
    %v1714 = vpop.permute.xlu0 %1713
    %1716 = vst.msk [vmem:[#allocation11 + $0x10] sm:$0xf] %vm308, %v1714
    %v1717 = vsel %vm102, %v1714, 0
    %1719 = vmatprep.subr.mxu0 0.0
    %1720 = vmatpush1.msra.mxu0 0.0
    %1721 = vmatprep.subr.mxu0 0.0
    %1722 = vmatpush1.msra.mxu0 0.0
    %1723 = vmatprep.subr.mxu0 0.0
    %1724 = vmatpush1.msra.mxu0 0.0
    %1725 = vmatprep.subr.mxu0 0.0
    %1726 = vmatpush1.msra.mxu0 0.0
    %1727 = vmatprep.subr.mxu0 0.0
    %1728 = vmatpush1.msra.mxu0 0.0
    %1729 = vmatprep.subr.mxu0 0.0
    %1730 = vmatpush1.msra.mxu0 0.0
    %1731 = vmatprep.subr.mxu0 0.0
    %1732 = vmatpush1.msra.mxu0 0.0
    %1733 = vmatprep.subr.mxu0 0.0
    %1734 = vmatpush1.msra.mxu0 0.0
    %1735 = vmatprep.subr.mxu0 0.0
    %1736 = vmatpush1.msra.mxu0 0.0
    %1737 = vmatprep.subr.mxu0 0.0
    %1738 = vmatpush1.msra.mxu0 0.0
    %1739 = vmatprep.subr.mxu0 0.0
    %1740 = vmatpush1.msra.mxu0 0.0
    %1741 = vmatprep.subr.mxu0 0.0
    %1742 = vmatpush1.msra.mxu0 0.0
    %1743 = vmatprep.subr.mxu0 0.0
    %1744 = vmatpush1.msra.mxu0 %v90
    %1745 = vmatprep.subr.mxu0 0.0
    %1746 = vmatpush1.msra.mxu0 %v89
    %1747 = vmatprep.subr.mxu0 0.0
    %1748 = vmatpush1.msra.mxu0 %v88
    %1749 = vmatprep.subr.mxu0 0.0
    %1750 = vmatpush1.msra.mxu0 %v87
    %1751 = vmatprep.subr.mxu0 0.0
    %1752 = vmatpush2.msra.mxu0 0.0
    %1753 = vmatprep.subr.mxu0 0.0
    %1754 = vmatpush2.msra.mxu0 0.0
    %1755 = vmatprep.subr.mxu0 0.0
    %1756 = vmatpush2.msra.mxu0 0.0
    %1757 = vmatprep.subr.mxu0 0.0
    %1758 = vmatpush2.msra.mxu0 0.0
    %1759 = vmatprep.subr.mxu0 0.0
    %1760 = vmatpush2.msra.mxu0 0.0
    %1761 = vmatprep.subr.mxu0 0.0
    %1762 = vmatpush2.msra.mxu0 0.0
    %1763 = vmatprep.subr.mxu0 0.0
    %1764 = vmatpush2.msra.mxu0 0.0
    %1765 = vmatprep.subr.mxu0 0.0
    %1766 = vmatpush2.msra.mxu0 0.0
    %1767 = vmatprep.subr.mxu0 0.0
    %1768 = vmatpush2.msra.mxu0 0.0
    %1769 = vmatprep.subr.mxu0 0.0
    %1770 = vmatpush2.msra.mxu0 0.0
    %1771 = vmatprep.subr.mxu0 0.0
    %1772 = vmatpush2.msra.mxu0 0.0
    %1773 = vmatprep.subr.mxu0 0.0
    %1774 = vmatpush2.msra.mxu0 0.0
    %1775 = vmatprep.subr.mxu0 0.0
    %1776 = vmatpush2.msra.mxu0 0.0
    %1777 = vmatprep.subr.mxu0 0.0
    %1778 = vmatpush2.msra.mxu0 0.0
    %1779 = vmatprep.subr.mxu0 0.0
    %1780 = vmatpush2.msra.mxu0 0.0
    %1781 = vmatprep.subr.mxu0 0.0
    %1782 = vmatpush2.msra.mxu0 0.0
    %1783 = vmatprep.mubr.f32.mxu0 0.0
    %1784 = vmatmul.mubr.f32.gmra.mxu0 %v1717
    %v1785 = vpop.f32.mrf.mxu0
    %v1786 = vadd.f32 0.0, %v1785
    %v1787 = vpop.f32.mrf.mxu0
    %1788 = vdwg.mxu0
    %v1790 = vrot.slane %v1786, 4
    %v1792 = vadd.f32 %v1166, %v1790
    %v1793 = vxor.u32 %v1792, 2147483648
    %v1794 = vmul.f32 %v1793, 1.442695
    %v1795 = vpow.pop %v1794
    %v1796 = vadd.f32 %v1795, 1.0
    %v1797 = vrcp.pop %v1796
    %v1798 = vmul.f32 1.0, %v1797
    %v1799 = vtanh.pop %v1792
    %v1801 = vrot.slane %v1705, 4
    %v1803 = vmul.f32 %v1798, %v1801
    %1805 = vrot.lane.b32.xlu0 %v1799, 64
    %v1806 = vpop.permute.xlu0 %1805
    %v1808 = vmul.f32 %v1798, %v1806
    %1810 = vrot.lane.b32.xlu0 %v1808, 32
    %v1811 = vpop.permute.xlu0 %1810
    %v1813 = vadd.f32 %v1803, %v1811
    %v1814 = vtanh.pop %v1813
    %1816 = vrot.lane.b32.xlu0 %v1814, 64
    %v1817 = vpop.permute.xlu0 %1816
    %v1819 = vmul.f32 %v1798, %v1817
    %1821 = vrot.lane.b32.xlu0 %v1819, 32
    %v1822 = vpop.permute.xlu0 %1821
    %1824 = vst.msk [vmem:[#allocation11 + $0x10] sm:$0xf0] %vm417, %v1822
    %v1825 = vrot.slane %v1819, 4
    %1826 = vrot.lane.b32.xlu0 %v1825, 32
    %v1827 = vpop.permute.xlu0 %1826
    %v1828 = vsel %vm102, %v1827, 0
    %1830 = vmatprep.subr.mxu0 0.0
    %1831 = vmatpush1.msra.mxu0 0.0
    %1832 = vmatprep.subr.mxu0 0.0
    %1833 = vmatpush1.msra.mxu0 0.0
    %1834 = vmatprep.subr.mxu0 0.0
    %1835 = vmatpush1.msra.mxu0 0.0
    %1836 = vmatprep.subr.mxu0 0.0
    %1837 = vmatpush1.msra.mxu0 0.0
    %1838 = vmatprep.subr.mxu0 0.0
    %1839 = vmatpush1.msra.mxu0 0.0
    %1840 = vmatprep.subr.mxu0 0.0
    %1841 = vmatpush1.msra.mxu0 0.0
    %1842 = vmatprep.subr.mxu0 0.0
    %1843 = vmatpush1.msra.mxu0 0.0
    %1844 = vmatprep.subr.mxu0 0.0
    %1845 = vmatpush1.msra.mxu0 0.0
    %1846 = vmatprep.subr.mxu0 0.0
    %1847 = vmatpush1.msra.mxu0 0.0
    %1848 = vmatprep.subr.mxu0 0.0
    %1849 = vmatpush1.msra.mxu0 0.0
    %1850 = vmatprep.subr.mxu0 0.0
    %1851 = vmatpush1.msra.mxu0 0.0
    %1852 = vmatprep.subr.mxu0 0.0
    %1853 = vmatpush1.msra.mxu0 0.0
    %1854 = vmatprep.subr.mxu0 0.0
    %1855 = vmatpush1.msra.mxu0 %v90
    %1856 = vmatprep.subr.mxu0 0.0
    %1857 = vmatpush1.msra.mxu0 %v89
    %1858 = vmatprep.subr.mxu0 0.0
    %1859 = vmatpush1.msra.mxu0 %v88
    %1860 = vmatprep.subr.mxu0 0.0
    %1861 = vmatpush1.msra.mxu0 %v87
    %1862 = vmatprep.subr.mxu0 0.0
    %1863 = vmatpush2.msra.mxu0 0.0
    %1864 = vmatprep.subr.mxu0 0.0
    %1865 = vmatpush2.msra.mxu0 0.0
    %1866 = vmatprep.subr.mxu0 0.0
    %1867 = vmatpush2.msra.mxu0 0.0
    %1868 = vmatprep.subr.mxu0 0.0
    %1869 = vmatpush2.msra.mxu0 0.0
    %1870 = vmatprep.subr.mxu0 0.0
    %1871 = vmatpush2.msra.mxu0 0.0
    %1872 = vmatprep.subr.mxu0 0.0
    %1873 = vmatpush2.msra.mxu0 0.0
    %1874 = vmatprep.subr.mxu0 0.0
    %1875 = vmatpush2.msra.mxu0 0.0
    %1876 = vmatprep.subr.mxu0 0.0
    %1877 = vmatpush2.msra.mxu0 0.0
    %1878 = vmatprep.subr.mxu0 0.0
    %1879 = vmatpush2.msra.mxu0 0.0
    %1880 = vmatprep.subr.mxu0 0.0
    %1881 = vmatpush2.msra.mxu0 0.0
    %1882 = vmatprep.subr.mxu0 0.0
    %1883 = vmatpush2.msra.mxu0 0.0
    %1884 = vmatprep.subr.mxu0 0.0
    %1885 = vmatpush2.msra.mxu0 0.0
    %1886 = vmatprep.subr.mxu0 0.0
    %1887 = vmatpush2.msra.mxu0 0.0
    %1888 = vmatprep.subr.mxu0 0.0
    %1889 = vmatpush2.msra.mxu0 0.0
    %1890 = vmatprep.subr.mxu0 0.0
    %1891 = vmatpush2.msra.mxu0 0.0
    %1892 = vmatprep.subr.mxu0 0.0
    %1893 = vmatpush2.msra.mxu0 0.0
    %1894 = vmatprep.mubr.f32.mxu0 0.0
    %1895 = vmatmul.mubr.f32.gmra.mxu0 %v1828
    %v1896 = vpop.f32.mrf.mxu0
    %v1897 = vadd.f32 0.0, %v1896
    %v1898 = vpop.f32.mrf.mxu0
    %1899 = vdwg.mxu0
    %v1900 = vadd.f32 %v1171, %v1897
    %v1901 = vxor.u32 %v1900, 2147483648
    %v1902 = vmul.f32 %v1901, 1.442695
    %v1903 = vpow.pop %v1902
    %v1904 = vadd.f32 %v1903, 1.0
    %v1905 = vrcp.pop %v1904
    %v1906 = vmul.f32 1.0, %v1905
    %v1907 = vtanh.pop %v1900
    %v1909 = vrot.slane %v1813, 4
    %v1911 = vmul.f32 %v1906, %v1909
    %1913 = vrot.lane.b32.xlu0 %v1907, 64
    %v1914 = vpop.permute.xlu0 %1913
    %v1916 = vmul.f32 %v1906, %v1914
    %1918 = vrot.lane.b32.xlu0 %v1916, 32
    %v1919 = vpop.permute.xlu0 %1918
    %v1921 = vadd.f32 %v1911, %v1919
    %v1922 = vtanh.pop %v1921
    %1924 = vrot.lane.b32.xlu0 %v1922, 64
    %v1925 = vpop.permute.xlu0 %1924
    %v1927 = vmul.f32 %v1906, %v1925
    %1929 = vrot.lane.b32.xlu0 %v1927, 32
    %v1930 = vpop.permute.xlu0 %1929
    %1932 = vst.msk [vmem:[#allocation11 + $0x18] sm:$0xf] %vm308, %v1930
    %v1933 = vsel %vm102, %v1930, 0
    %1935 = vmatprep.subr.mxu0 0.0
    %1936 = vmatpush1.msra.mxu0 0.0
    %1937 = vmatprep.subr.mxu0 0.0
    %1938 = vmatpush1.msra.mxu0 0.0
    %1939 = vmatprep.subr.mxu0 0.0
    %1940 = vmatpush1.msra.mxu0 0.0
    %1941 = vmatprep.subr.mxu0 0.0
    %1942 = vmatpush1.msra.mxu0 0.0
    %1943 = vmatprep.subr.mxu0 0.0
    %1944 = vmatpush1.msra.mxu0 0.0
    %1945 = vmatprep.subr.mxu0 0.0
    %1946 = vmatpush1.msra.mxu0 0.0
    %1947 = vmatprep.subr.mxu0 0.0
    %1948 = vmatpush1.msra.mxu0 0.0
    %1949 = vmatprep.subr.mxu0 0.0
    %1950 = vmatpush1.msra.mxu0 0.0
    %1951 = vmatprep.subr.mxu0 0.0
    %1952 = vmatpush1.msra.mxu0 0.0
    %1953 = vmatprep.subr.mxu0 0.0
    %1954 = vmatpush1.msra.mxu0 0.0
    %1955 = vmatprep.subr.mxu0 0.0
    %1956 = vmatpush1.msra.mxu0 0.0
    %1957 = vmatprep.subr.mxu0 0.0
    %1958 = vmatpush1.msra.mxu0 0.0
    %1959 = vmatprep.subr.mxu0 0.0
    %1960 = vmatpush1.msra.mxu0 %v90
    %1961 = vmatprep.subr.mxu0 0.0
    %1962 = vmatpush1.msra.mxu0 %v89
    %1963 = vmatprep.subr.mxu0 0.0
    %1964 = vmatpush1.msra.mxu0 %v88
    %1965 = vmatprep.subr.mxu0 0.0
    %1966 = vmatpush1.msra.mxu0 %v87
    %1967 = vmatprep.subr.mxu0 0.0
    %1968 = vmatpush2.msra.mxu0 0.0
    %1969 = vmatprep.subr.mxu0 0.0
    %1970 = vmatpush2.msra.mxu0 0.0
    %1971 = vmatprep.subr.mxu0 0.0
    %1972 = vmatpush2.msra.mxu0 0.0
    %1973 = vmatprep.subr.mxu0 0.0
    %1974 = vmatpush2.msra.mxu0 0.0
    %1975 = vmatprep.subr.mxu0 0.0
    %1976 = vmatpush2.msra.mxu0 0.0
    %1977 = vmatprep.subr.mxu0 0.0
    %1978 = vmatpush2.msra.mxu0 0.0
    %1979 = vmatprep.subr.mxu0 0.0
    %1980 = vmatpush2.msra.mxu0 0.0
    %1981 = vmatprep.subr.mxu0 0.0
    %1982 = vmatpush2.msra.mxu0 0.0
    %1983 = vmatprep.subr.mxu0 0.0
    %1984 = vmatpush2.msra.mxu0 0.0
    %1985 = vmatprep.subr.mxu0 0.0
    %1986 = vmatpush2.msra.mxu0 0.0
    %1987 = vmatprep.subr.mxu0 0.0
    %1988 = vmatpush2.msra.mxu0 0.0
    %1989 = vmatprep.subr.mxu0 0.0
    %1990 = vmatpush2.msra.mxu0 0.0
    %1991 = vmatprep.subr.mxu0 0.0
    %1992 = vmatpush2.msra.mxu0 0.0
    %1993 = vmatprep.subr.mxu0 0.0
    %1994 = vmatpush2.msra.mxu0 0.0
    %1995 = vmatprep.subr.mxu0 0.0
    %1996 = vmatpush2.msra.mxu0 0.0
    %1997 = vmatprep.subr.mxu0 0.0
    %1998 = vmatpush2.msra.mxu0 0.0
    %1999 = vmatprep.mubr.f32.mxu0 0.0
    %2000 = vmatmul.mubr.f32.gmra.mxu0 %v1933
    %v2001 = vpop.f32.mrf.mxu0
    %v2002 = vadd.f32 0.0, %v2001
    %v2003 = vpop.f32.mrf.mxu0
    %2004 = vdwg.mxu0
    %v2006 = vrot.slane %v2002, 4
    %v2008 = vadd.f32 %v1171, %v2006
    %v2009 = vxor.u32 %v2008, 2147483648
    %v2010 = vmul.f32 %v2009, 1.442695
    %v2011 = vpow.pop %v2010
    %v2012 = vadd.f32 %v2011, 1.0
    %v2013 = vrcp.pop %v2012
    %v2014 = vmul.f32 1.0, %v2013
    %v2015 = vtanh.pop %v2008
    %v2017 = vrot.slane %v1921, 4
    %v2019 = vmul.f32 %v2014, %v2017
    %2021 = vrot.lane.b32.xlu0 %v2015, 64
    %v2022 = vpop.permute.xlu0 %2021
    %v2024 = vmul.f32 %v2014, %v2022
    %2026 = vrot.lane.b32.xlu0 %v2024, 32
    %v2027 = vpop.permute.xlu0 %2026
    %v2029 = vadd.f32 %v2019, %v2027
    %v2030 = vtanh.pop %v2029
    %2032 = vrot.lane.b32.xlu0 %v2030, 64
    %v2033 = vpop.permute.xlu0 %2032
    %v2035 = vmul.f32 %v2014, %v2033
    %2037 = vrot.lane.b32.xlu0 %v2035, 32
    %v2038 = vpop.permute.xlu0 %2037
    %2040 = vst.msk [vmem:[#allocation11 + $0x18] sm:$0xf0] %vm417, %v2038
    %s2041 = scalar_lea.vmem [#allocation12], 4
    %2042 = vst.msk [vmem:[%s2041 - $0x4] sm:$0xf0] %vm417, %v2038
    %2044 = vrot.lane.b32.xlu0 %v2029, 96
    %v2045 = vpop.permute.xlu0 %2044
    %s2047 = scalar_lea.vmem [#allocation14], 4
    %2048 = vst.msk [vmem:[%s2047 - $0x4] sm:$0xf0] %vm417, %v2045
    // Predicated region
    $region42: #{lstm_forward.1} parent=1 // pred_check
      _
    $region43: #{lstm_forward.1} parent=1 // pred_check_branch
      %2050 = sbr.rel (0) target = $region45
    $region44: #{lstm_forward.1} parent=1 // pred_region
      %s2052 = ssub.s32 512, 512
      %2053 = vsyncadd [#allocation5], %s2052
      %s2054 = sshll.u32 [#allocation11], 4
      %s2055 = int_to_ptr.vmem [resolvable:$true] %s2054
      %2060 = dma.vmem_to_hbm [thread:$0]  %s2055, 512, %s6, [#allocation5], 128, 128, 8
    $region45: #{lstm_forward.1} parent=1 // pred_fallthru
      _
    // Predicated region
    $region46: #{lstm_forward.1} parent=1 // pred_check
      _
    $region47: #{lstm_forward.1} parent=1 // pred_check_branch
      %2062 = sbr.rel (0) target = $region49
    $region48: #{lstm_forward.1} parent=1 // pred_region
      %s2064 = ssub.s32 128, 128
      %2065 = vsyncadd [#allocation13], %s2064
      %s2066 = sshll.u32 [#allocation12], 4
      %s2067 = int_to_ptr.vmem [resolvable:$true] %s2066
      %2072 = dma.vmem_to_hbm [thread:$0]  %s2067, 128, %s7, [#allocation13], 64, 64, 4
    $region49: #{lstm_forward.1} parent=1 // pred_fallthru
      _
    // Predicated region
    $region50: #{lstm_forward.1} parent=1 // pred_check
      _
    $region51: #{lstm_forward.1} parent=1 // pred_check_branch
      %2074 = sbr.rel (0) target = $region53
    $region52: #{lstm_forward.1} parent=1 // pred_region
      %s2076 = ssub.s32 128, 128
      %2077 = vsyncadd [#allocation13], %s2076
      %s2078 = sshll.u32 [#allocation14], 4
      %s2079 = int_to_ptr.vmem [resolvable:$true] %s2078
      %2084 = dma.vmem_to_hbm [thread:$0]  %s2079, 128, %s8, [#allocation13], 64, 64, 4
    $region53: #{lstm_forward.1} parent=1 // pred_fallthru
      _
    // Predicated region
    $region54: #{lstm_forward.1} parent=1 // pred_check
      _
    $region55: #{lstm_forward.1} parent=1 // pred_check_branch
      %2086 = sbr.rel (0) target = $region57
    $region56: #{lstm_forward.1} parent=1 // pred_region
      %2087 = dma.done [#allocation5], 512
    $region57: #{lstm_forward.1} parent=1 // pred_fallthru
      _
    // Predicated region
    $region58: #{lstm_forward.1} parent=1 // pred_check
      _
    $region59: #{lstm_forward.1} parent=1 // pred_check_branch
      %2089 = sbr.rel (0) target = $region61
    $region60: #{lstm_forward.1} parent=1 // pred_region
      %2090 = dma.done [#allocation13], 128
    $region61: #{lstm_forward.1} parent=1 // pred_fallthru
      _
    // Predicated region
    $region62: #{lstm_forward.1} parent=1 // pred_check
      _
    $region63: #{lstm_forward.1} parent=1 // pred_check_branch
      %2092 = sbr.rel (0) target = $region65
    $region64: #{lstm_forward.1} parent=1 // pred_region
      %2093 = dma.done [#allocation13], 128
    $region65: #{lstm_forward.1} parent=1 // pred_fallthru
      _
    %2094 = vsyncpa [#allocation4], 1
    %2095 = vsyncpa [#allocation7], 1
    %2096 = vsyncpa [#allocation10], 1
    %2097 = vsyncpa [#allocation5], 1
    %2098 = vsyncpa [#allocation13], 1

</llo_original>
